<compile_context>
chip_gen: v6e
topology: v6e:2x2x1
jax: 0.10.0
libtpu: 0.0.40
codegen_flags: <defaults>
</compile_context>

<pallas_src>
import functools

import jax
import jax.numpy as jnp
from jax import lax
from jax.experimental import pallas as pl
from jax.experimental.pallas import tpu as pltpu


# ----------------------------------------------------------------------------
# Pallas kernels
# ----------------------------------------------------------------------------
def _conv_stats_kernel(*refs, has_preact):
    """o = [relu(a + boff)] @ w + bias (bf16 MXU, f32 accumulate), plus
    per-channel sum / sum-of-squares of o accumulated into resident (8, C)
    partial sums (VALU adds across vregs; no per-step cross-sublane reduce)."""
    if has_preact:
        a_ref, w_ref, bias_ref, boff_ref, o_ref, sum_ref, ssq_ref = refs
    else:
        a_ref, w_ref, bias_ref, o_ref, sum_ref, ssq_ref = refs
        boff_ref = None

    @pl.when(pl.program_id(0) == 0)
    def _():
        sum_ref[...] = jnp.zeros_like(sum_ref)
        ssq_ref[...] = jnp.zeros_like(ssq_ref)

    a = a_ref[...]
    if has_preact:
        # ActNorm scale already folded into the weight rows: only add + relu.
        a = jnp.maximum(a.astype(jnp.float32) + boff_ref[...], 0.0)
    acc = jnp.dot(a.astype(jnp.bfloat16), w_ref[...],
                  preferred_element_type=jnp.float32) + bias_ref[...]
    o_ref[...] = acc.astype(o_ref.dtype)

    # Sublane-parallel partial statistics of the f32 accumulator.
    # TODO(synk): Welford-style merge for very large M (one-pass sum/ssq).
    tm, nout = acc.shape
    hb = acc.reshape(tm // 8, 8, nout)
    sum_ref[...] += jnp.sum(hb, axis=0)
    ssq_ref[...] += jnp.sum(hb * hb, axis=0)


def _pick_tile(dim, candidates):
    for t in candidates:
        if dim % t == 0:
            return t
    return dim


def conv_fused(a, w, bias, preact_bias=None):
    """h = relu(a + preact_bias) @ w + bias, plus per-channel sum / ssq of h.

    a: (M, K) (M % 8 == 0), w: (K, Nout), bias: (Nout,).
    Returns (h_bf16, col_sum_f32[Nout], col_ssq_f32[Nout]).
    """
    M, K = a.shape
    Nout = w.shape[1]
    assert M % 8 == 0, f"M={M} must be a multiple of 8"  # TODO(synk): pad ragged M
    tm = _pick_tile(M, (512, 256, 128, 64, 32, 16, 8))
    nm = M // tm

    bias = jnp.asarray(bias, jnp.float32).reshape(1, Nout)
    in_specs = [pl.BlockSpec((tm, K), lambda i: (i, 0)),
                pl.BlockSpec((K, Nout), lambda i: (0, 0)),
                pl.BlockSpec((1, Nout), lambda i: (0, 0))]
    inputs = [a.astype(jnp.bfloat16), w.astype(jnp.bfloat16), bias]
    has_preact = preact_bias is not None
    if has_preact:
        in_specs.append(pl.BlockSpec((1, K), lambda i: (0, 0)))
        inputs.append(jnp.asarray(preact_bias, jnp.float32).reshape(1, K))

    est = (2 * tm * K * 2 + 2 * K * Nout * 2 + Nout * 4
           + 2 * tm * Nout * 2 + 2 * 8 * Nout * 4)
    vmem_limit = int(min(max(2 * est + (8 << 20), 32 << 20), 48 << 20))

    kernel = functools.partial(_conv_stats_kernel, has_preact=has_preact)
    h, sum8, ssq8 = pl.pallas_call(
        kernel,
        out_shape=(jax.ShapeDtypeStruct((M, Nout), jnp.bfloat16),
                   jax.ShapeDtypeStruct((8, Nout), jnp.float32),
                   jax.ShapeDtypeStruct((8, Nout), jnp.float32)),
        grid_spec=pltpu.PrefetchScalarGridSpec(
            num_scalar_prefetch=0,
            grid=(nm,),
            in_specs=in_specs,
            out_specs=(pl.BlockSpec((tm, Nout), lambda i: (i, 0)),
                       pl.BlockSpec((8, Nout), lambda i: (0, 0)),
                       pl.BlockSpec((8, Nout), lambda i: (0, 0)))),
        compiler_params=pltpu.CompilerParams(
            # Statistics accumulate across the M axis -> sequential.
            dimension_semantics=("arbitrary",),
            vmem_limit_bytes=vmem_limit),
    )(*inputs)
    return h, jnp.sum(sum8, axis=0), jnp.sum(ssq8, axis=0)


def _conv3_kernel(x_ref, w_ref, bias_ref, boff_ref, o_ref, *, H, W, c_half):
    """3x3 valid conv over one padded image, streamed as 9 tap matmuls.

    x_ref: (1, H+2, W+2, C) bf16 padded pre-activation image (read ONCE).
    w_ref: (9*C, NP) bf16 weight slab, rows ordered (kh, kw, cin).
    bias_ref: (1, NP) f32; boff_ref: (1, C) f32; o_ref: (1, H*W, NP) f32.
    """
    C = x_ref.shape[-1]
    NP = o_ref.shape[-1]
    # ActNorm2 affine (scale folded into w) + ReLU once per image, shared by
    # all 9 taps.
    x = jnp.maximum(x_ref[0].astype(jnp.float32)
                    + boff_ref[...].reshape(1, 1, C), 0.0)
    acc = jnp.broadcast_to(bias_ref[...], (H * W, NP)).astype(jnp.float32)
    for kh in range(3):
        for kw in range(3):
            a = x[kh:kh + H, kw:kw + W, :].reshape(H * W, C).astype(jnp.bfloat16)
            t = kh * 3 + kw
            acc = acc + jnp.dot(a, w_ref[t * C:(t + 1) * C, :],
                                preferred_element_type=jnp.float32)
    # sigmoid(x + 2) fused on the first c_half (real) output channels.
    col = lax.broadcasted_iota(jnp.int32, acc.shape, 1)
    o_ref[0] = jnp.where(col < c_half, jax.nn.sigmoid(acc + 2.0), acc)


def conv3_taps(h2_img, w3m, bias_p, boff, *, H, W, c_half):
    # TODO(synk): tile along H for large images (whole padded image per grid
    # step assumes it fits comfortably in VMEM).
    N, H2, W2, C = h2_img.shape
    NP = w3m.shape[1]
    est = (2 * H2 * W2 * C * 2 + 2 * 9 * C * NP * 2
           + 2 * H * W * NP * 4 + 2 * H2 * W2 * C * 4)
    vmem_limit = int(min(max(2 * est + (8 << 20), 32 << 20), 48 << 20))
    kernel = functools.partial(_conv3_kernel, H=H, W=W, c_half=c_half)
    return pl.pallas_call(
        kernel,
        out_shape=jax.ShapeDtypeStruct((N, H * W, NP), jnp.float32),
        grid_spec=pltpu.PrefetchScalarGridSpec(
            num_scalar_prefetch=0,
            grid=(N,),
            in_specs=[pl.BlockSpec((1, H2, W2, C), lambda n: (n, 0, 0, 0)),
                      pl.BlockSpec((9 * C, NP), lambda n: (0, 0)),
                      pl.BlockSpec((1, NP), lambda n: (0, 0)),
                      pl.BlockSpec((1, C), lambda n: (0, 0))],
            out_specs=pl.BlockSpec((1, H * W, NP), lambda n: (n, 0, 0))),
        compiler_params=pltpu.CompilerParams(
            dimension_semantics=("parallel",),
            vmem_limit_bytes=vmem_limit),
    )(h2_img, w3m, bias_p, boff)


# ----------------------------------------------------------------------------
# Host-side glue
# ----------------------------------------------------------------------------
def im2col(x_nhwc, ksize, pad):
    """ksize x ksize patches -> (N*Ho*Wo, k*k*C); column order (kh, kw, C)."""
    N, H, W, C = x_nhwc.shape
    if pad > 0:
        x_nhwc = jnp.pad(x_nhwc, ((0, 0), (pad, pad), (pad, pad), (0, 0)))
    Ho = H + 2 * pad - ksize + 1
    Wo = W + 2 * pad - ksize + 1
    patches = []
    for i in range(ksize):
        for j in range(ksize):
            patches.append(x_nhwc[:, i:i + Ho, j:j + Wo, :])
    p = jnp.stack(patches, axis=3)               # (N, Ho, Wo, k*k, C)
    return p.reshape(N * Ho * Wo, ksize * ksize * C)


def conv_weight_to_mat(w_oihw):
    """torch (Cout, Cin, kh, kw) -> matmul weight (kh*kw*Cin, Cout)."""
    cout, cin, kh, kw = w_oihw.shape
    return jnp.transpose(w_oihw, (2, 3, 1, 0)).reshape(kh * kw * cin, cout)


def finalize_actnorm(col_sum, col_ssq, m_total):
    """torch ActNorm init: s = 1/(std+1e-6) (unbiased std), b = -mean."""
    mean = col_sum / m_total
    var = (col_ssq - m_total * mean * mean) / (m_total - 1.0)
    std = jnp.sqrt(jnp.maximum(var, 0.0))
    s = 1.0 / (std + 1e-6)
    return s.reshape(1, -1), (-mean).reshape(1, -1)


def coupling_forward(x_nchw, params, channels):
    N, _, H, W = x_nchw.shape
    c_half = channels // 2
    H2, W2 = H + 2, W + 2
    M1 = float(N * H * W)

    x = jnp.transpose(x_nchw, (0, 2, 3, 1)).astype(jnp.float32)      # NHWC

    # ---- conv1: 3x3, pad 1 (tiny K passed as a single un-tiled block);
    #      ActNorm1 statistics fused into the epilogue. ----------------------
    p1 = im2col(x, 3, 1).astype(jnp.bfloat16)                        # (M, 9*Cin)
    h1, sum1, ssq1 = conv_fused(p1, conv_weight_to_mat(params["w1"]),
                                params["b1"])
    s1, b1n = finalize_actnorm(sum1, ssq1, M1)

    # ---- conv2: 1x1, pad 1.  ActNorm1 scale folded into the weight rows
    #      (relu(a*s+b) = s*relu(a + b/s), s > 0); border rows of the padded
    #      output equal the bias and never touch the MXU; ActNorm2 interior
    #      stats are fused, border contribution added analytically. ----------
    w2 = jnp.transpose(params["w2"].reshape(512, 512), (1, 0))       # (Cin, Cout)
    h2_int, sum2i, ssq2i = conv_fused(h1, w2 * s1.reshape(-1, 1),
                                      params["b2"], preact_bias=b1n / s1)
    b2 = params["b2"].astype(jnp.float32)
    n_border = float(N * (H2 * W2 - H * W))
    s2, b2n = finalize_actnorm(sum2i + n_border * b2,
                               ssq2i + n_border * b2 * b2,
                               float(N * H2 * W2))

    # Padded bf16 activation image for conv3 (border rows == bias).
    # TODO(synk): write conv2's interior rows straight into this buffer via
    # input_output_aliases instead of the host-side set().
    h2_img = jnp.broadcast_to(b2.astype(jnp.bfloat16).reshape(1, 1, 1, 512),
                              (N, H2, W2, 512))
    h2_img = h2_img.at[:, 1:-1, 1:-1, :].set(h2_int.reshape(N, H, W, 512))

    # ---- conv3: 3x3 valid, tap-streamed.  exp(scale_factor) folded into the
    #      weight columns, ActNorm2 scale into the rows; output channels
    #      zero-padded to 128 lanes; sigmoid(+2) fused on the first half. ----
    NP = 128
    esc = jnp.exp(params["scale_factor"].reshape(channels)).astype(jnp.float32)
    w3s = params["w3"] * esc[:, None, None, None] * s2.reshape(1, 512, 1, 1)
    w3m = jnp.pad(conv_weight_to_mat(w3s), ((0, 0), (0, NP - channels)))
    b3p = jnp.pad(params["b3"] * esc, (0, NP - channels)).reshape(1, NP)
    z = conv3_taps(h2_img, w3m.astype(jnp.bfloat16),
                   b3p.astype(jnp.float32), b2n / s2,
                   H=H, W=W, c_half=c_half)                          # (N, H*W, 128)

    z_img = z.reshape(N, H, W, NP)
    s_out = jnp.transpose(z_img[..., :c_half], (0, 3, 1, 2))
    t_out = jnp.transpose(z_img[..., c_half:channels], (0, 3, 1, 2))
    return s_out, t_out


# ----------------------------------------------------------------------------
# Pure-JAX reference (NCHW, lax.conv) for correctness check
# ----------------------------------------------------------------------------
def _actnorm_ref(h):
    per_channel = jnp.transpose(h, (1, 0, 2, 3)).reshape(h.shape[1], -1)
    mean = jnp.mean(per_channel, axis=1)
    std = jnp.std(per_channel, axis=1, ddof=1)
    s = (1.0 / (std + 1e-6)).reshape(1, -1, 1, 1)
    b = (-mean).reshape(1, -1, 1, 1)
    return h * s + b


def coupling_ref(x, params, channels):
    def conv(x, w, b, pad):
        out = lax.conv_general_dilated(
            x, w, (1, 1), [(pad, pad), (pad, pad)],
            dimension_numbers=("NCHW", "OIHW", "NCHW"),
            precision=lax.Precision.HIGHEST)
        return out + b.reshape(1, -1, 1, 1)

    h1 = conv(x, params["w1"], params["b1"], 1)
    r1 = jax.nn.relu(_actnorm_ref(h1))
    h2 = conv(r1, params["w2"], params["b2"], 1)
    r2 = jax.nn.relu(_actnorm_ref(h2))
    h3 = conv(r2, params["w3"], params["b3"], 0)
    z = h3 * jnp.exp(params["scale_factor"])[None]
    s = z[:, :channels // 2]
    t = z[:, channels // 2:]
    return jax.nn.sigmoid(s + 2.0), t


# ----------------------------------------------------------------------------
if __name__ == "__main__":
    channels = 4          # module channels; input has channels // 2 = 2
    N, H, W = 2, 16, 16

    key = jax.random.PRNGKey(0)
    k = jax.random.split(key, 8)

    # Deterministic synthetic parameters (shapes per __init__).
    # NOTE: the torch __init__ zeroes conv_layer3 and scale_factor; we use
    # small random values instead so the kernel compute is actually exercised.
    params = {
        "w1": 0.05 * jax.random.normal(k[0], (512, channels // 2, 3, 3), jnp.float32),
        "b1": 0.05 * jax.random.normal(k[1], (512,), jnp.float32),
        "w2": 0.02 * jax.random.normal(k[2], (512, 512, 1, 1), jnp.float32),
        "b2": 0.02 * jax.random.normal(k[3], (512,), jnp.float32),
        "w3": 0.02 * jax.random.normal(k[4], (channels, 512, 3, 3), jnp.float32),
        "b3": 0.02 * jax.random.normal(k[5], (channels,), jnp.float32),
        "scale_factor": 0.1 * jax.random.normal(k[6], (channels, 1, 1), jnp.float32),
    }

    x = jax.random.normal(k[7], (N, channels // 2, H, W), jnp.float32)

    s_out, t_out = coupling_forward(x, params, channels)
    jax.block_until_ready((s_out, t_out))

    s_ref, t_ref = coupling_ref(x, params, channels)
    assert s_out.shape == (N, channels // 2, H, W)
    assert t_out.shape == (N, channels // 2, H, W)
    # bf16 intermediates + bf16 MXU inputs (f32 accumulation) -> loose tolerance.
    assert jnp.allclose(s_out, s_ref, atol=4e-2, rtol=4e-2), \
        float(jnp.max(jnp.abs(s_out - s_ref)))
    assert jnp.allclose(t_out, t_ref, atol=4e-2, rtol=4e-2), \
        float(jnp.max(jnp.abs(t_out - t_ref)))

    print("KERNEL_OK")
</pallas_src>

<mosaic_0001>
module attributes {stable_mosaic.version = 11 : i64} {
  func.func @_conv_stats_kernel(%arg0: i32, %arg1: memref<512x18xbf16, #tpu.memory_space<vmem>>, %arg2: memref<18x512xbf16, #tpu.memory_space<vmem>>, %arg3: memref<1x512xf32, #tpu.memory_space<vmem>>, %arg4: memref<512x512xbf16, #tpu.memory_space<vmem>>, %arg5: memref<8x512xf32, #tpu.memory_space<vmem>>, %arg6: memref<8x512xf32, #tpu.memory_space<vmem>>) attributes {dimension_semantics = [#tpu.dimension_semantics<arbitrary>], iteration_bounds = array<i64: 1>, scalar_prefetch = 0 : i64, scratch_operands = 0 : i64, tpu.core_type = #tpu.core_type<tc>, window_params = [{transform_indices = @transform_0, window_bounds = array<i64: 512, 18>}, {pipeline_mode = #tpu.pipeline_mode<synchronous>, transform_indices = @transform_1, window_bounds = array<i64: 18, 512>}, {pipeline_mode = #tpu.pipeline_mode<synchronous>, transform_indices = @transform_2, window_bounds = array<i64: 1, 512>}, {transform_indices = @transform_3, window_bounds = array<i64: 512, 512>}, {pipeline_mode = #tpu.pipeline_mode<synchronous>, transform_indices = @transform_4, window_bounds = array<i64: 8, 512>}, {pipeline_mode = #tpu.pipeline_mode<synchronous>, transform_indices = @transform_5, window_bounds = array<i64: 8, 512>}]} {
    %c0_i32 = arith.constant 0 : i32
    %0 = arith.cmpi eq, %arg0, %c0_i32 : i32
    %1 = arith.extui %0 : i1 to i32
    %c0_i32_0 = arith.constant 0 : i32
    %2 = arith.cmpi ne, %1, %c0_i32_0 : i32
    scf.if %2 {
      %cst_18 = arith.constant 0.000000e+00 : f32
      %21 = vector.broadcast %cst_18 : f32 to vector<8x512xf32>
      %c0_19 = arith.constant 0 : index
      %c0_20 = arith.constant 0 : index
      %22 = vector.load %arg5[%c0_19, %c0_20] : memref<8x512xf32, #tpu.memory_space<vmem>>, vector<8x512xf32>
      tpu.vector_store %arg5[%c0_19, %c0_20], %21 {strides = array<i32>} : memref<8x512xf32, #tpu.memory_space<vmem>>, vector<8x512xf32>,
      %cst_21 = arith.constant 0.000000e+00 : f32
      %23 = vector.broadcast %cst_21 : f32 to vector<8x512xf32>
      %c0_22 = arith.constant 0 : index
      %c0_23 = arith.constant 0 : index
      %24 = vector.load %arg6[%c0_22, %c0_23] : memref<8x512xf32, #tpu.memory_space<vmem>>, vector<8x512xf32>
      tpu.vector_store %arg6[%c0_22, %c0_23], %23 {strides = array<i32>} : memref<8x512xf32, #tpu.memory_space<vmem>>, vector<8x512xf32>,
    } else {
    }
    %c0 = arith.constant 0 : index
    %c0_1 = arith.constant 0 : index
    %3 = vector.load %arg1[%c0, %c0_1] : memref<512x18xbf16, #tpu.memory_space<vmem>>, vector<512x18xbf16>
    %c0_2 = arith.constant 0 : index
    %c0_3 = arith.constant 0 : index
    %4 = vector.load %arg2[%c0_2, %c0_3] : memref<18x512xbf16, #tpu.memory_space<vmem>>, vector<18x512xbf16>
    %cst = arith.constant dense<0.000000e+00> : vector<512x512xf32>
    %5 = tpu.matmul %3, %4, %cst {dimension_numbers = #tpu.dot_dimension_numbers<[1], [0], [0], [1], [0, 0, 1, 1], [], []>} : vector<512x18xbf16>, vector<18x512xbf16>, vector<512x512xf32> -> vector<512x512xf32>
    %c0_4 = arith.constant 0 : index
    %c0_5 = arith.constant 0 : index
    %6 = vector.load %arg3[%c0_4, %c0_5] : memref<1x512xf32, #tpu.memory_space<vmem>>, vector<1x512xf32>
    %7 = vector.broadcast %6 : vector<1x512xf32> to vector<512x512xf32>
    %8 = arith.addf %5, %7 : vector<512x512xf32>
    %9 = arith.truncf %8 : vector<512x512xf32> to vector<512x512xbf16>
    %c0_6 = arith.constant 0 : index
    %c0_7 = arith.constant 0 : index
    %10 = vector.load %arg4[%c0_6, %c0_7] : memref<512x512xbf16, #tpu.memory_space<vmem>>, vector<512x512xbf16>
    tpu.vector_store %arg4[%c0_6, %c0_7], %9 {strides = array<i32>} : memref<512x512xbf16, #tpu.memory_space<vmem>>, vector<512x512xbf16>,
    %11 = vector.shape_cast %8 : vector<512x512xf32> to vector<64x8x512xf32>
    %c0_8 = arith.constant 0 : index
    %c0_9 = arith.constant 0 : index
    %12 = vector.load %arg5[%c0_8, %c0_9] : memref<8x512xf32, #tpu.memory_space<vmem>>, vector<8x512xf32>
    %cst_10 = arith.constant dense<0.000000e+00> : vector<8x512xf32>
    %13 = vector.multi_reduction <add>, %11, %cst_10 [0] : vector<64x8x512xf32> to vector<8x512xf32>
    %14 = arith.addf %12, %13 : vector<8x512xf32>
    %c0_11 = arith.constant 0 : index
    %c0_12 = arith.constant 0 : index
    %15 = vector.load %arg5[%c0_11, %c0_12] : memref<8x512xf32, #tpu.memory_space<vmem>>, vector<8x512xf32>
    tpu.vector_store %arg5[%c0_11, %c0_12], %14 {strides = array<i32>} : memref<8x512xf32, #tpu.memory_space<vmem>>, vector<8x512xf32>,
    %c0_13 = arith.constant 0 : index
    %c0_14 = arith.constant 0 : index
    %16 = vector.load %arg6[%c0_13, %c0_14] : memref<8x512xf32, #tpu.memory_space<vmem>>, vector<8x512xf32>
    %17 = arith.mulf %11, %11 : vector<64x8x512xf32>
    %cst_15 = arith.constant dense<0.000000e+00> : vector<8x512xf32>
    %18 = vector.multi_reduction <add>, %17, %cst_15 [0] : vector<64x8x512xf32> to vector<8x512xf32>
    %19 = arith.addf %16, %18 : vector<8x512xf32>
    %c0_16 = arith.constant 0 : index
    %c0_17 = arith.constant 0 : index
    %20 = vector.load %arg6[%c0_16, %c0_17] : memref<8x512xf32, #tpu.memory_space<vmem>>, vector<8x512xf32>
    tpu.vector_store %arg6[%c0_16, %c0_17], %19 {strides = array<i32>} : memref<8x512xf32, #tpu.memory_space<vmem>>, vector<8x512xf32>,
    return
  }
  func.func @transform_0(%arg0: i32) -> (i32, i32) {
    %c0_i32 = arith.constant 0 : i32
    %c0_i32_0 = arith.constant 0 : i32
    return %arg0, %c0_i32 : i32, i32
  }
  func.func @transform_1(%arg0: i32) -> (i32, i32) {
    %c0_i32 = arith.constant 0 : i32
    %c0_i32_0 = arith.constant 0 : i32
    %c0_i32_1 = arith.constant 0 : i32
    return %c0_i32, %c0_i32_0 : i32, i32
  }
  func.func @transform_2(%arg0: i32) -> (i32, i32) {
    %c0_i32 = arith.constant 0 : i32
    %c0_i32_0 = arith.constant 0 : i32
    %c0_i32_1 = arith.constant 0 : i32
    return %c0_i32, %c0_i32_0 : i32, i32
  }
  func.func @transform_3(%arg0: i32) -> (i32, i32) {
    %c0_i32 = arith.constant 0 : i32
    %c0_i32_0 = arith.constant 0 : i32
    return %arg0, %c0_i32 : i32, i32
  }
  func.func @transform_4(%arg0: i32) -> (i32, i32) {
    %c0_i32 = arith.constant 0 : i32
    %c0_i32_0 = arith.constant 0 : i32
    %c0_i32_1 = arith.constant 0 : i32
    return %c0_i32, %c0_i32_0 : i32, i32
  }
  func.func @transform_5(%arg0: i32) -> (i32, i32) {
    %c0_i32 = arith.constant 0 : i32
    %c0_i32_0 = arith.constant 0 : i32
    %c0_i32_1 = arith.constant 0 : i32
    return %c0_i32, %c0_i32_0 : i32, i32
  }
}

</mosaic_0001>

<llo_original>
// kernel: tpu_custom_call.1
$region0: #{tpu_custom_call.1}
  #allocation0 [shape = 'u32[]', space=smem, size = 0x4, offset = 0x4, fixed_abs, tag = 'smem constant byte address 0x4 - core index']
  #allocation1 [shape = 'u32[144,128]{1,0:T(1,128)}', space=vmem, size = 0x12000, scoped, tag = 'internal scratch']
  %s0 = inlined_call_operand.vmem [shape: bf16[512,18], index: 0, kind: input, shape index: {}]
  %s1 = inlined_call_operand.vmem [shape: bf16[18,512], index: 1, kind: input, shape index: {}]
  %s2 = inlined_call_operand.vmem [shape: f32[1,512], index: 2, kind: input, shape index: {}]
  %s3 = inlined_call_operand.hbm [shape: bf16[512,512], index: 3, kind: output, shape index: {0}]
  %s4 = inlined_call_operand.hbm [shape: f32[8,512], index: 4, kind: output, shape index: {1}]
  %s5 = inlined_call_operand.hbm [shape: f32[8,512], index: 5, kind: output, shape index: {2}]
  %6 = xla_tuple %s3, %s4, %s5
  %s7 = sld [smem:[#allocation0]]
  $region42: #{tpu_custom_call.1} parent=0
    _
  %s9 = ssub.s32 1, %s7
  %s10 = scalar_select 0, %s9, %s7
  $region1: #{tpu_custom_call.1} parent=0
    #allocation2 [shape = 'u8[524288]{0}', space=vmem, size = 0x80000, scoped, tag = 'output window, operand 0, single buffered']
    #allocation3 [shape = 's32[1]{0}', space=sflag, size = 0x4, scoped, tag = 'scoped memory for tpu_custom_call.1']
    #allocation4 [shape = 'u8[16384]{0}', space=vmem, size = 0x4000, scoped, tag = 'output window, operand 1, single buffered']
    #allocation5 [shape = 's32[1]{0}', space=sflag, size = 0x4, scoped, tag = 'scoped memory for tpu_custom_call.1']
    #allocation6 [shape = 'u8[16384]{0}', space=vmem, size = 0x4000, scoped, tag = 'output window, operand 2, single buffered']
    %11 = vsyncpa [#allocation3], 0
    %12 = vsyncpa [#allocation5], 0
    // Predicated region
    $region2: #{tpu_custom_call.1} parent=1 // pred_check
      _
    $region3: #{tpu_custom_call.1} parent=1 // pred_check_branch
      %14 = sbr.rel (0) target = $region5
    $region4: #{tpu_custom_call.1} parent=1 // pred_region
      _
    $region5: #{tpu_custom_call.1} parent=1 // pred_fallthru
      _
    // Predicated region
    $region6: #{tpu_custom_call.1} parent=1 // pred_check
      _
    $region7: #{tpu_custom_call.1} parent=1 // pred_check_branch
      %16 = sbr.rel (0) target = $region9
    $region8: #{tpu_custom_call.1} parent=1 // pred_region
      _
    $region9: #{tpu_custom_call.1} parent=1 // pred_fallthru
      _
    // Predicated region
    $region10: #{tpu_custom_call.1} parent=1 // pred_check
      _
    $region11: #{tpu_custom_call.1} parent=1 // pred_check_branch
      %18 = sbr.rel (0) target = $region13
    $region12: #{tpu_custom_call.1} parent=1 // pred_region
      _
    $region13: #{tpu_custom_call.1} parent=1 // pred_fallthru
      _
    %p20 = scmp.eq.s32.totalorder 0, 0
    // Predicated region
    $region14: #{tpu_custom_call.1} parent=1 // pred_check
      %p21 = pneg %p20
    $region15: #{tpu_custom_call.1} parent=1 // pred_check_branch
      %23 = sbr.rel (%p21) target = $region17
    $region16: #{tpu_custom_call.1} parent=1 // pred_region
      %24 = vst [vmem:[#allocation4] sm:$0xff] 0.0
      %25 = vst [vmem:[#allocation4 + $0x8] sm:$0xff] 0.0
      %26 = vst [vmem:[#allocation4 + $0x10] sm:$0xff] 0.0
      %27 = vst [vmem:[#allocation4 + $0x18] sm:$0xff] 0.0
      %28 = vst [vmem:[#allocation6] sm:$0xff] 0.0
      %29 = vst [vmem:[#allocation6 + $0x8] sm:$0xff] 0.0
      %30 = vst [vmem:[#allocation6 + $0x10] sm:$0xff] 0.0
      %31 = vst [vmem:[#allocation6 + $0x18] sm:$0xff] 0.0
    $region17: #{tpu_custom_call.1} parent=1 // pred_fallthru
      _
    %v32 = vld [vmem:[%s0] sm:$0xf]
    %v33 = vld [vmem:[%s0 + $0x4] sm:$0xf]
    %v34 = vld [vmem:[%s0 + $0x8] sm:$0xf]
    %v35 = vld [vmem:[%s0 + $0xc] sm:$0xf]
    %v36 = vld [vmem:[%s0 + $0x10] sm:$0xf]
    %v37 = vld [vmem:[%s0 + $0x14] sm:$0xf]
    %v38 = vld [vmem:[%s0 + $0x18] sm:$0xf]
    %v39 = vld [vmem:[%s0 + $0x1c] sm:$0xf]
    %v40 = vld [vmem:[%s0 + $0x20] sm:$0xf]
    %v41 = vld [vmem:[%s0 + $0x24] sm:$0xf]
    %v42 = vld [vmem:[%s0 + $0x28] sm:$0xf]
    %v43 = vld [vmem:[%s0 + $0x2c] sm:$0xf]
    %v44 = vld [vmem:[%s0 + $0x30] sm:$0xf]
    %v45 = vld [vmem:[%s0 + $0x34] sm:$0xf]
    %v46 = vld [vmem:[%s0 + $0x38] sm:$0xf]
    %v47 = vld [vmem:[%s0 + $0x3c] sm:$0xf]
    %v48 = vld [vmem:[%s0 + $0x40] sm:$0xf]
    %v49 = vld [vmem:[%s0 + $0x44] sm:$0xf]
    %v50 = vld [vmem:[%s0 + $0x48] sm:$0xf]
    %v51 = vld [vmem:[%s0 + $0x4c] sm:$0xf]
    %v52 = vld [vmem:[%s0 + $0x50] sm:$0xf]
    %v53 = vld [vmem:[%s0 + $0x54] sm:$0xf]
    %v54 = vld [vmem:[%s0 + $0x58] sm:$0xf]
    %v55 = vld [vmem:[%s0 + $0x5c] sm:$0xf]
    %v56 = vld [vmem:[%s0 + $0x60] sm:$0xf]
    %v57 = vld [vmem:[%s0 + $0x64] sm:$0xf]
    %v58 = vld [vmem:[%s0 + $0x68] sm:$0xf]
    %v59 = vld [vmem:[%s0 + $0x6c] sm:$0xf]
    %v60 = vld [vmem:[%s0 + $0x70] sm:$0xf]
    %v61 = vld [vmem:[%s0 + $0x74] sm:$0xf]
    %v62 = vld [vmem:[%s0 + $0x78] sm:$0xf]
    %v63 = vld [vmem:[%s0 + $0x7c] sm:$0xf]
    %v64 = vld [vmem:[%s0 + $0x80] sm:$0xf]
    %v65 = vld [vmem:[%s0 + $0x84] sm:$0xf]
    %v66 = vld [vmem:[%s0 + $0x88] sm:$0xf]
    %v67 = vld [vmem:[%s0 + $0x8c] sm:$0xf]
    %v68 = vld [vmem:[%s0 + $0x90] sm:$0xf]
    %v69 = vld [vmem:[%s0 + $0x94] sm:$0xf]
    %v70 = vld [vmem:[%s0 + $0x98] sm:$0xf]
    %v71 = vld [vmem:[%s0 + $0x9c] sm:$0xf]
    %v72 = vld [vmem:[%s0 + $0xa0] sm:$0xf]
    %v73 = vld [vmem:[%s0 + $0xa4] sm:$0xf]
    %v74 = vld [vmem:[%s0 + $0xa8] sm:$0xf]
    %v75 = vld [vmem:[%s0 + $0xac] sm:$0xf]
    %v76 = vld [vmem:[%s0 + $0xb0] sm:$0xf]
    %v77 = vld [vmem:[%s0 + $0xb4] sm:$0xf]
    %v78 = vld [vmem:[%s0 + $0xb8] sm:$0xf]
    %v79 = vld [vmem:[%s0 + $0xbc] sm:$0xf]
    %v80 = vld [vmem:[%s0 + $0xc0] sm:$0xf]
    %v81 = vld [vmem:[%s0 + $0xc4] sm:$0xf]
    %v82 = vld [vmem:[%s0 + $0xc8] sm:$0xf]
    %v83 = vld [vmem:[%s0 + $0xcc] sm:$0xf]
    %v84 = vld [vmem:[%s0 + $0xd0] sm:$0xf]
    %v85 = vld [vmem:[%s0 + $0xd4] sm:$0xf]
    %v86 = vld [vmem:[%s0 + $0xd8] sm:$0xf]
    %v87 = vld [vmem:[%s0 + $0xdc] sm:$0xf]
    %v88 = vld [vmem:[%s0 + $0xe0] sm:$0xf]
    %v89 = vld [vmem:[%s0 + $0xe4] sm:$0xf]
    %v90 = vld [vmem:[%s0 + $0xe8] sm:$0xf]
    %v91 = vld [vmem:[%s0 + $0xec] sm:$0xf]
    %v92 = vld [vmem:[%s0 + $0xf0] sm:$0xf]
    %v93 = vld [vmem:[%s0 + $0xf4] sm:$0xf]
    %v94 = vld [vmem:[%s0 + $0xf8] sm:$0xf]
    %v95 = vld [vmem:[%s0 + $0xfc] sm:$0xf]
    %v96 = vld [vmem:[%s1] sm:$0xff]
    %v97 = vld [vmem:[%s1 + $0x8] sm:$0xff]
    %v98 = vld [vmem:[%s1 + $0x10] sm:$0xff]
    %v99 = vld [vmem:[%s1 + $0x18] sm:$0xff]
    %v100 = vld [vmem:[%s1 + $0x20] sm:$0x11]
    %v101 = vld [vmem:[%s1 + $0x28] sm:$0x11]
    %v102 = vld [vmem:[%s2] sm:$0xf]
    %v104 = vlaneseq
    %v105 = vshrl.u32 %v104, 7
    %v106 = vsub.s32 0, %v105
    %v107 = vrot.slane %v102, %v106
    %v108 = vlaneseq
    %v109 = vshrl.u32 %v108, 7
    %v110 = vsub.s32 1, %v109
    %v111 = vrot.slane %v102, %v110
    %v112 = vlaneseq
    %v113 = vshrl.u32 %v112, 7
    %v114 = vsub.s32 2, %v113
    %v115 = vrot.slane %v102, %v114
    %v116 = vlaneseq
    %v117 = vshrl.u32 %v116, 7
    %v118 = vsub.s32 3, %v117
    %v119 = vrot.slane %v102, %v118
    %v188 = vunpack.c.l.b16 %v32
    %v189 = vunpack.c.l.b16 %v33
    %v190 = vunpack.c.l.b16 %v34
    %v191 = vunpack.c.l.b16 %v35
    %v192 = vunpack.c.l.b16 %v36
    %v193 = vunpack.c.l.b16 %v37
    %v194 = vunpack.c.l.b16 %v38
    %v195 = vunpack.c.l.b16 %v39
    %v196 = vunpack.c.l.b16 %v40
    %v197 = vunpack.c.l.b16 %v41
    %v198 = vunpack.c.l.b16 %v42
    %v199 = vunpack.c.l.b16 %v43
    %v200 = vunpack.c.l.b16 %v44
    %v201 = vunpack.c.l.b16 %v45
    %v202 = vunpack.c.l.b16 %v46
    %v203 = vunpack.c.l.b16 %v47
    %v204 = vunpack.c.l.b16 %v48
    %v205 = vunpack.c.l.b16 %v49
    %v206 = vunpack.c.l.b16 %v50
    %v207 = vunpack.c.l.b16 %v51
    %v208 = vunpack.c.l.b16 %v52
    %v209 = vunpack.c.l.b16 %v53
    %v210 = vunpack.c.l.b16 %v54
    %v211 = vunpack.c.l.b16 %v55
    %v212 = vunpack.c.l.b16 %v56
    %v213 = vunpack.c.l.b16 %v57
    %v214 = vunpack.c.l.b16 %v58
    %v215 = vunpack.c.l.b16 %v59
    %v216 = vunpack.c.l.b16 %v60
    %v217 = vunpack.c.l.b16 %v61
    %v218 = vunpack.c.l.b16 %v62
    %v219 = vunpack.c.l.b16 %v63
    %v220 = vunpack.c.l.b16 %v64
    %v221 = vunpack.c.l.b16 %v65
    %v222 = vunpack.c.l.b16 %v66
    %v223 = vunpack.c.l.b16 %v67
    %v224 = vunpack.c.l.b16 %v68
    %v225 = vunpack.c.l.b16 %v69
    %v226 = vunpack.c.l.b16 %v70
    %v227 = vunpack.c.l.b16 %v71
    %v228 = vunpack.c.l.b16 %v72
    %v229 = vunpack.c.l.b16 %v73
    %v230 = vunpack.c.l.b16 %v74
    %v231 = vunpack.c.l.b16 %v75
    %v232 = vunpack.c.l.b16 %v76
    %v233 = vunpack.c.l.b16 %v77
    %v234 = vunpack.c.l.b16 %v78
    %v235 = vunpack.c.l.b16 %v79
    %v236 = vunpack.c.l.b16 %v80
    %v237 = vunpack.c.l.b16 %v81
    %v238 = vunpack.c.l.b16 %v82
    %v239 = vunpack.c.l.b16 %v83
    %v240 = vunpack.c.l.b16 %v84
    %v241 = vunpack.c.l.b16 %v85
    %v242 = vunpack.c.l.b16 %v86
    %v243 = vunpack.c.l.b16 %v87
    %v244 = vunpack.c.l.b16 %v88
    %v245 = vunpack.c.l.b16 %v89
    %v246 = vunpack.c.l.b16 %v90
    %v247 = vunpack.c.l.b16 %v91
    %v248 = vunpack.c.l.b16 %v92
    %v249 = vunpack.c.l.b16 %v93
    %v250 = vunpack.c.l.b16 %v94
    %v251 = vunpack.c.l.b16 %v95
    %v252 = vpack.c.b16 %v189, %v188
    %v253 = vpack.c.b16 %v191, %v190
    %v254 = vpack.c.b16 %v193, %v192
    %v255 = vpack.c.b16 %v195, %v194
    %v256 = vpack.c.b16 %v197, %v196
    %v257 = vpack.c.b16 %v199, %v198
    %v258 = vpack.c.b16 %v201, %v200
    %v259 = vpack.c.b16 %v203, %v202
    %v260 = vpack.c.b16 %v205, %v204
    %v261 = vpack.c.b16 %v207, %v206
    %v262 = vpack.c.b16 %v209, %v208
    %v263 = vpack.c.b16 %v211, %v210
    %v264 = vpack.c.b16 %v213, %v212
    %v265 = vpack.c.b16 %v215, %v214
    %v266 = vpack.c.b16 %v217, %v216
    %v267 = vpack.c.b16 %v219, %v218
    %v268 = vpack.c.b16 %v221, %v220
    %v269 = vpack.c.b16 %v223, %v222
    %v270 = vpack.c.b16 %v225, %v224
    %v271 = vpack.c.b16 %v227, %v226
    %v272 = vpack.c.b16 %v229, %v228
    %v273 = vpack.c.b16 %v231, %v230
    %v274 = vpack.c.b16 %v233, %v232
    %v275 = vpack.c.b16 %v235, %v234
    %v276 = vpack.c.b16 %v237, %v236
    %v277 = vpack.c.b16 %v239, %v238
    %v278 = vpack.c.b16 %v241, %v240
    %v279 = vpack.c.b16 %v243, %v242
    %v280 = vpack.c.b16 %v245, %v244
    %v281 = vpack.c.b16 %v247, %v246
    %v282 = vpack.c.b16 %v249, %v248
    %v283 = vpack.c.b16 %v251, %v250
    %v290 = vunpack.c.l.b16 %v96
    %v291 = vunpack.c.h.b16 %v96
    %v292 = vunpack.c.l.b16 %v97
    %v293 = vunpack.c.h.b16 %v97
    %v294 = vunpack.c.l.b16 %v98
    %v295 = vunpack.c.h.b16 %v98
    %v296 = vunpack.c.l.b16 %v99
    %v297 = vunpack.c.h.b16 %v99
    %v298 = vunpack.c.l.b16 %v100
    %v299 = vunpack.c.h.b16 %v100
    %v300 = vunpack.c.l.b16 %v101
    %v301 = vunpack.c.h.b16 %v101
    %v302 = vpack.c.b16 %v294, %v290
    %v303 = vpack.c.b16 %v295, %v291
    %v304 = vpack.c.b16 %v296, %v292
    %v305 = vpack.c.b16 %v297, %v293
    %v306 = vpack.c.b16 %v298, %v298
    %v307 = vpack.c.b16 %v299, %v299
    %v308 = vpack.c.b16 %v300, %v300
    %v309 = vpack.c.b16 %v301, %v301
    %vm314 = vcmask 146432
    %v316 = vsel %vm314, %v252, 0
    %v319 = vsel %vm314, %v253, 0
    %v322 = vsel %vm314, %v254, 0
    %v325 = vsel %vm314, %v255, 0
    %v328 = vsel %vm314, %v256, 0
    %v331 = vsel %vm314, %v257, 0
    %v334 = vsel %vm314, %v258, 0
    %v337 = vsel %vm314, %v259, 0
    %v340 = vsel %vm314, %v260, 0
    %v343 = vsel %vm314, %v261, 0
    %v346 = vsel %vm314, %v262, 0
    %v349 = vsel %vm314, %v263, 0
    %v352 = vsel %vm314, %v264, 0
    %v355 = vsel %vm314, %v265, 0
    %v358 = vsel %vm314, %v266, 0
    %v361 = vsel %vm314, %v267, 0
    %v364 = vsel %vm314, %v268, 0
    %v367 = vsel %vm314, %v269, 0
    %v370 = vsel %vm314, %v270, 0
    %v373 = vsel %vm314, %v271, 0
    %v376 = vsel %vm314, %v272, 0
    %v379 = vsel %vm314, %v273, 0
    %v382 = vsel %vm314, %v274, 0
    %v385 = vsel %vm314, %v275, 0
    %v388 = vsel %vm314, %v276, 0
    %v391 = vsel %vm314, %v277, 0
    %v394 = vsel %vm314, %v278, 0
    %v397 = vsel %vm314, %v279, 0
    %v400 = vsel %vm314, %v280, 0
    %v403 = vsel %vm314, %v281, 0
    %v406 = vsel %vm314, %v282, 0
    %v409 = vsel %vm314, %v283, 0
    %vm411 = vcmask 1040384
    %v413 = vsel %vm411, %v306, 0
    %v416 = vsel %vm411, %v307, 0
    %v419 = vsel %vm411, %v308, 0
    %v422 = vsel %vm411, %v309, 0
    %424 = vmatprep.subr.bf16.mxu0 0
    %425 = vmatpush1.bf16.msra.mxu0 0
    %426 = vmatprep.subr.bf16.mxu0 0
    %427 = vmatpush1.bf16.msra.mxu0 0
    %428 = vmatprep.subr.bf16.mxu0 0
    %429 = vmatpush1.bf16.msra.mxu0 0
    %430 = vmatprep.subr.bf16.mxu0 0
    %431 = vmatpush1.bf16.msra.mxu0 0
    %432 = vmatprep.subr.bf16.mxu0 0
    %433 = vmatpush1.bf16.msra.mxu0 0
    %434 = vmatprep.subr.bf16.mxu0 0
    %435 = vmatpush1.bf16.msra.mxu0 0
    %436 = vmatprep.subr.bf16.mxu0 %v416
    %437 = vmatpush1.bf16.msra.mxu0 %v413
    %438 = vmatprep.subr.bf16.mxu0 %v303
    %439 = vmatpush1.bf16.msra.mxu0 %v302
    %440 = vmatprep.subr.bf16.mxu0 0
    %441 = vmatpush2.bf16.msra.mxu0 0
    %442 = vmatprep.subr.bf16.mxu0 0
    %443 = vmatpush2.bf16.msra.mxu0 0
    %444 = vmatprep.subr.bf16.mxu0 0
    %445 = vmatpush2.bf16.msra.mxu0 0
    %446 = vmatprep.subr.bf16.mxu0 0
    %447 = vmatpush2.bf16.msra.mxu0 0
    %448 = vmatprep.subr.bf16.mxu0 0
    %449 = vmatpush2.bf16.msra.mxu0 0
    %450 = vmatprep.subr.bf16.mxu0 0
    %451 = vmatpush2.bf16.msra.mxu0 0
    %452 = vmatprep.subr.bf16.mxu0 0
    %453 = vmatpush2.bf16.msra.mxu0 0
    %454 = vmatprep.subr.bf16.mxu0 0
    %455 = vmatpush2.bf16.msra.mxu0 0
    %456 = vmatprep.mubr.bf16.mxu0 0
    %457 = vmatmul.mubr.bf16.gmra.mxu0 %v316
    %v458 = vpop.f32.mrf.mxu0
    %v459 = vadd.f32 %v107, %v458
    %v460 = vpop.f32.mrf.mxu0
    %v461 = vadd.f32 %v111, %v460
    %v462 = vpop.f32.mrf.mxu0
    %v463 = vadd.f32 %v107, %v462
    %v464 = vpop.f32.mrf.mxu0
    %v465 = vadd.f32 %v111, %v464
    %466 = vmatprep.mubr.bf16.mxu0 0
    %467 = vmatmul.mubr.bf16.gmra.mxu0 %v319
    %v468 = vpop.f32.mrf.mxu0
    %v469 = vadd.f32 %v107, %v468
    %v470 = vpop.f32.mrf.mxu0
    %v471 = vadd.f32 %v111, %v470
    %v472 = vpop.f32.mrf.mxu0
    %v473 = vadd.f32 %v107, %v472
    %v474 = vpop.f32.mrf.mxu0
    %v475 = vadd.f32 %v111, %v474
    %476 = vmatprep.mubr.bf16.mxu0 0
    %477 = vmatmul.mubr.bf16.gmra.mxu0 %v322
    %v478 = vpop.f32.mrf.mxu0
    %v479 = vadd.f32 %v107, %v478
    %v480 = vpop.f32.mrf.mxu0
    %v481 = vadd.f32 %v111, %v480
    %v482 = vpop.f32.mrf.mxu0
    %v483 = vadd.f32 %v107, %v482
    %v484 = vpop.f32.mrf.mxu0
    %v485 = vadd.f32 %v111, %v484
    %486 = vmatprep.mubr.bf16.mxu0 0
    %487 = vmatmul.mubr.bf16.gmra.mxu0 %v325
    %v488 = vpop.f32.mrf.mxu0
    %v489 = vadd.f32 %v107, %v488
    %v490 = vpop.f32.mrf.mxu0
    %v491 = vadd.f32 %v111, %v490
    %v492 = vpop.f32.mrf.mxu0
    %v493 = vadd.f32 %v107, %v492
    %v494 = vpop.f32.mrf.mxu0
    %v495 = vadd.f32 %v111, %v494
    %496 = vmatprep.mubr.bf16.mxu0 0
    %497 = vmatmul.mubr.bf16.gmra.mxu0 %v328
    %v498 = vpop.f32.mrf.mxu0
    %v499 = vadd.f32 %v107, %v498
    %v500 = vpop.f32.mrf.mxu0
    %v501 = vadd.f32 %v111, %v500
    %v502 = vpop.f32.mrf.mxu0
    %v503 = vadd.f32 %v107, %v502
    %v504 = vpop.f32.mrf.mxu0
    %v505 = vadd.f32 %v111, %v504
    %506 = vmatprep.mubr.bf16.mxu0 0
    %507 = vmatmul.mubr.bf16.gmra.mxu0 %v331
    %v508 = vpop.f32.mrf.mxu0
    %v509 = vadd.f32 %v107, %v508
    %v510 = vpop.f32.mrf.mxu0
    %v511 = vadd.f32 %v111, %v510
    %v512 = vpop.f32.mrf.mxu0
    %v513 = vadd.f32 %v107, %v512
    %v514 = vpop.f32.mrf.mxu0
    %v515 = vadd.f32 %v111, %v514
    %516 = vmatprep.mubr.bf16.mxu0 0
    %517 = vmatmul.mubr.bf16.gmra.mxu0 %v334
    %v518 = vpop.f32.mrf.mxu0
    %v519 = vadd.f32 %v107, %v518
    %v520 = vpop.f32.mrf.mxu0
    %v521 = vadd.f32 %v111, %v520
    %v522 = vpop.f32.mrf.mxu0
    %v523 = vadd.f32 %v107, %v522
    %v524 = vpop.f32.mrf.mxu0
    %v525 = vadd.f32 %v111, %v524
    %526 = vmatprep.mubr.bf16.mxu0 0
    %527 = vmatmul.mubr.bf16.gmra.mxu0 %v337
    %v528 = vpop.f32.mrf.mxu0
    %v529 = vadd.f32 %v107, %v528
    %v530 = vpop.f32.mrf.mxu0
    %v531 = vadd.f32 %v111, %v530
    %v532 = vpop.f32.mrf.mxu0
    %v533 = vadd.f32 %v107, %v532
    %v534 = vpop.f32.mrf.mxu0
    %v535 = vadd.f32 %v111, %v534
    %536 = vmatprep.mubr.bf16.mxu0 0
    %537 = vmatmul.mubr.bf16.gmra.mxu0 %v340
    %v538 = vpop.f32.mrf.mxu0
    %v539 = vadd.f32 %v107, %v538
    %v540 = vpop.f32.mrf.mxu0
    %v541 = vadd.f32 %v111, %v540
    %v542 = vpop.f32.mrf.mxu0
    %v543 = vadd.f32 %v107, %v542
    %v544 = vpop.f32.mrf.mxu0
    %v545 = vadd.f32 %v111, %v544
    %546 = vmatprep.mubr.bf16.mxu0 0
    %547 = vmatmul.mubr.bf16.gmra.mxu0 %v343
    %v548 = vpop.f32.mrf.mxu0
    %v549 = vadd.f32 %v107, %v548
    %v550 = vpop.f32.mrf.mxu0
    %v551 = vadd.f32 %v111, %v550
    %v552 = vpop.f32.mrf.mxu0
    %v553 = vadd.f32 %v107, %v552
    %v554 = vpop.f32.mrf.mxu0
    %v555 = vadd.f32 %v111, %v554
    %556 = vmatprep.mubr.bf16.mxu0 0
    %557 = vmatmul.mubr.bf16.gmra.mxu0 %v346
    %v558 = vpop.f32.mrf.mxu0
    %v559 = vadd.f32 %v107, %v558
    %v560 = vpop.f32.mrf.mxu0
    %v561 = vadd.f32 %v111, %v560
    %v562 = vpop.f32.mrf.mxu0
    %v563 = vadd.f32 %v107, %v562
    %v564 = vpop.f32.mrf.mxu0
    %v565 = vadd.f32 %v111, %v564
    %566 = vmatprep.mubr.bf16.mxu0 0
    %567 = vmatmul.mubr.bf16.gmra.mxu0 %v349
    %v568 = vpop.f32.mrf.mxu0
    %v569 = vadd.f32 %v107, %v568
    %v570 = vpop.f32.mrf.mxu0
    %v571 = vadd.f32 %v111, %v570
    %v572 = vpop.f32.mrf.mxu0
    %v573 = vadd.f32 %v107, %v572
    %v574 = vpop.f32.mrf.mxu0
    %v575 = vadd.f32 %v111, %v574
    %576 = vmatprep.mubr.bf16.mxu0 0
    %577 = vmatmul.mubr.bf16.gmra.mxu0 %v352
    %v578 = vpop.f32.mrf.mxu0
    %v579 = vadd.f32 %v107, %v578
    %v580 = vpop.f32.mrf.mxu0
    %v581 = vadd.f32 %v111, %v580
    %v582 = vpop.f32.mrf.mxu0
    %v583 = vadd.f32 %v107, %v582
    %v584 = vpop.f32.mrf.mxu0
    %v585 = vadd.f32 %v111, %v584
    %586 = vmatprep.mubr.bf16.mxu0 0
    %587 = vmatmul.mubr.bf16.gmra.mxu0 %v355
    %v588 = vpop.f32.mrf.mxu0
    %v589 = vadd.f32 %v107, %v588
    %v590 = vpop.f32.mrf.mxu0
    %v591 = vadd.f32 %v111, %v590
    %v592 = vpop.f32.mrf.mxu0
    %v593 = vadd.f32 %v107, %v592
    %v594 = vpop.f32.mrf.mxu0
    %v595 = vadd.f32 %v111, %v594
    %596 = vmatprep.mubr.bf16.mxu0 0
    %597 = vmatmul.mubr.bf16.gmra.mxu0 %v358
    %v598 = vpop.f32.mrf.mxu0
    %v599 = vadd.f32 %v107, %v598
    %v600 = vpop.f32.mrf.mxu0
    %v601 = vadd.f32 %v111, %v600
    %v602 = vpop.f32.mrf.mxu0
    %v603 = vadd.f32 %v107, %v602
    %v604 = vpop.f32.mrf.mxu0
    %v605 = vadd.f32 %v111, %v604
    %606 = vmatprep.mubr.bf16.mxu0 0
    %607 = vmatmul.mubr.bf16.gmra.mxu0 %v361
    %v608 = vpop.f32.mrf.mxu0
    %v609 = vadd.f32 %v107, %v608
    %v610 = vpop.f32.mrf.mxu0
    %v611 = vadd.f32 %v111, %v610
    %v612 = vpop.f32.mrf.mxu0
    %v613 = vadd.f32 %v107, %v612
    %v614 = vpop.f32.mrf.mxu0
    %v615 = vadd.f32 %v111, %v614
    %616 = vmatprep.mubr.bf16.mxu0 0
    %617 = vmatmul.mubr.bf16.gmra.mxu0 %v364
    %v618 = vpop.f32.mrf.mxu0
    %v619 = vadd.f32 %v107, %v618
    %v620 = vpop.f32.mrf.mxu0
    %v621 = vadd.f32 %v111, %v620
    %v622 = vpop.f32.mrf.mxu0
    %v623 = vadd.f32 %v107, %v622
    %v624 = vpop.f32.mrf.mxu0
    %v625 = vadd.f32 %v111, %v624
    %626 = vmatprep.mubr.bf16.mxu0 0
    %627 = vmatmul.mubr.bf16.gmra.mxu0 %v367
    %v628 = vpop.f32.mrf.mxu0
    %v629 = vadd.f32 %v107, %v628
    %v630 = vpop.f32.mrf.mxu0
    %v631 = vadd.f32 %v111, %v630
    %v632 = vpop.f32.mrf.mxu0
    %v633 = vadd.f32 %v107, %v632
    %v634 = vpop.f32.mrf.mxu0
    %v635 = vadd.f32 %v111, %v634
    %636 = vmatprep.mubr.bf16.mxu0 0
    %637 = vmatmul.mubr.bf16.gmra.mxu0 %v370
    %v638 = vpop.f32.mrf.mxu0
    %v639 = vadd.f32 %v107, %v638
    %v640 = vpop.f32.mrf.mxu0
    %v641 = vadd.f32 %v111, %v640
    %v642 = vpop.f32.mrf.mxu0
    %v643 = vadd.f32 %v107, %v642
    %v644 = vpop.f32.mrf.mxu0
    %v645 = vadd.f32 %v111, %v644
    %646 = vmatprep.mubr.bf16.mxu0 0
    %647 = vmatmul.mubr.bf16.gmra.mxu0 %v373
    %v648 = vpop.f32.mrf.mxu0
    %v649 = vadd.f32 %v107, %v648
    %v650 = vpop.f32.mrf.mxu0
    %v651 = vadd.f32 %v111, %v650
    %v652 = vpop.f32.mrf.mxu0
    %v653 = vadd.f32 %v107, %v652
    %v654 = vpop.f32.mrf.mxu0
    %v655 = vadd.f32 %v111, %v654
    %656 = vmatprep.mubr.bf16.mxu0 0
    %657 = vmatmul.mubr.bf16.gmra.mxu0 %v376
    %v658 = vpop.f32.mrf.mxu0
    %v659 = vadd.f32 %v107, %v658
    %v660 = vpop.f32.mrf.mxu0
    %v661 = vadd.f32 %v111, %v660
    %v662 = vpop.f32.mrf.mxu0
    %v663 = vadd.f32 %v107, %v662
    %v664 = vpop.f32.mrf.mxu0
    %v665 = vadd.f32 %v111, %v664
    %666 = vmatprep.mubr.bf16.mxu0 0
    %667 = vmatmul.mubr.bf16.gmra.mxu0 %v379
    %v668 = vpop.f32.mrf.mxu0
    %v669 = vadd.f32 %v107, %v668
    %v670 = vpop.f32.mrf.mxu0
    %v671 = vadd.f32 %v111, %v670
    %v672 = vpop.f32.mrf.mxu0
    %v673 = vadd.f32 %v107, %v672
    %v674 = vpop.f32.mrf.mxu0
    %v675 = vadd.f32 %v111, %v674
    %676 = vmatprep.mubr.bf16.mxu0 0
    %677 = vmatmul.mubr.bf16.gmra.mxu0 %v382
    %v678 = vpop.f32.mrf.mxu0
    %v679 = vadd.f32 %v107, %v678
    %v680 = vpop.f32.mrf.mxu0
    %v681 = vadd.f32 %v111, %v680
    %v682 = vpop.f32.mrf.mxu0
    %v683 = vadd.f32 %v107, %v682
    %v684 = vpop.f32.mrf.mxu0
    %v685 = vadd.f32 %v111, %v684
    %686 = vmatprep.mubr.bf16.mxu0 0
    %687 = vmatmul.mubr.bf16.gmra.mxu0 %v385
    %v688 = vpop.f32.mrf.mxu0
    %v689 = vadd.f32 %v107, %v688
    %v690 = vpop.f32.mrf.mxu0
    %v691 = vadd.f32 %v111, %v690
    %v692 = vpop.f32.mrf.mxu0
    %v693 = vadd.f32 %v107, %v692
    %v694 = vpop.f32.mrf.mxu0
    %v695 = vadd.f32 %v111, %v694
    %696 = vmatprep.mubr.bf16.mxu0 0
    %697 = vmatmul.mubr.bf16.gmra.mxu0 %v388
    %v698 = vpop.f32.mrf.mxu0
    %v699 = vadd.f32 %v107, %v698
    %v700 = vpop.f32.mrf.mxu0
    %v701 = vadd.f32 %v111, %v700
    %v702 = vpop.f32.mrf.mxu0
    %v703 = vadd.f32 %v107, %v702
    %v704 = vpop.f32.mrf.mxu0
    %v705 = vadd.f32 %v111, %v704
    %706 = vmatprep.mubr.bf16.mxu0 0
    %707 = vmatmul.mubr.bf16.gmra.mxu0 %v391
    %v708 = vpop.f32.mrf.mxu0
    %v709 = vadd.f32 %v107, %v708
    %v710 = vpop.f32.mrf.mxu0
    %v711 = vadd.f32 %v111, %v710
    %v712 = vpop.f32.mrf.mxu0
    %v713 = vadd.f32 %v107, %v712
    %v714 = vpop.f32.mrf.mxu0
    %v715 = vadd.f32 %v111, %v714
    %716 = vmatprep.mubr.bf16.mxu0 0
    %717 = vmatmul.mubr.bf16.gmra.mxu0 %v394
    %v718 = vpop.f32.mrf.mxu0
    %v719 = vadd.f32 %v107, %v718
    %v720 = vpop.f32.mrf.mxu0
    %v721 = vadd.f32 %v111, %v720
    %v722 = vpop.f32.mrf.mxu0
    %v723 = vadd.f32 %v107, %v722
    %v724 = vpop.f32.mrf.mxu0
    %v725 = vadd.f32 %v111, %v724
    %726 = vmatprep.mubr.bf16.mxu0 0
    %727 = vmatmul.mubr.bf16.gmra.mxu0 %v397
    %v728 = vpop.f32.mrf.mxu0
    %v729 = vadd.f32 %v107, %v728
    %v730 = vpop.f32.mrf.mxu0
    %v731 = vadd.f32 %v111, %v730
    %v732 = vpop.f32.mrf.mxu0
    %v733 = vadd.f32 %v107, %v732
    %v734 = vpop.f32.mrf.mxu0
    %v735 = vadd.f32 %v111, %v734
    %736 = vmatprep.mubr.bf16.mxu0 0
    %737 = vmatmul.mubr.bf16.gmra.mxu0 %v400
    %v738 = vpop.f32.mrf.mxu0
    %v739 = vadd.f32 %v107, %v738
    %v740 = vpop.f32.mrf.mxu0
    %v741 = vadd.f32 %v111, %v740
    %v742 = vpop.f32.mrf.mxu0
    %v743 = vadd.f32 %v107, %v742
    %v744 = vpop.f32.mrf.mxu0
    %v745 = vadd.f32 %v111, %v744
    %746 = vmatprep.mubr.bf16.mxu0 0
    %747 = vmatmul.mubr.bf16.gmra.mxu0 %v403
    %v748 = vpop.f32.mrf.mxu0
    %v749 = vadd.f32 %v107, %v748
    %v750 = vpop.f32.mrf.mxu0
    %v751 = vadd.f32 %v111, %v750
    %v752 = vpop.f32.mrf.mxu0
    %v753 = vadd.f32 %v107, %v752
    %v754 = vpop.f32.mrf.mxu0
    %v755 = vadd.f32 %v111, %v754
    %756 = vmatprep.mubr.bf16.mxu0 0
    %757 = vmatmul.mubr.bf16.gmra.mxu0 %v406
    %v758 = vpop.f32.mrf.mxu0
    %v759 = vadd.f32 %v107, %v758
    %v760 = vpop.f32.mrf.mxu0
    %v761 = vadd.f32 %v111, %v760
    %v762 = vpop.f32.mrf.mxu0
    %v763 = vadd.f32 %v107, %v762
    %v764 = vpop.f32.mrf.mxu0
    %v765 = vadd.f32 %v111, %v764
    %766 = vmatprep.mubr.bf16.mxu0 0
    %767 = vmatmul.mubr.bf16.gmra.mxu0 %v409
    %v768 = vpop.f32.mrf.mxu0
    %v769 = vadd.f32 %v107, %v768
    %v770 = vpop.f32.mrf.mxu0
    %v771 = vadd.f32 %v111, %v770
    %v772 = vpop.f32.mrf.mxu0
    %v773 = vadd.f32 %v107, %v772
    %v774 = vpop.f32.mrf.mxu0
    %v775 = vadd.f32 %v111, %v774
    %776 = vdwg.mxu0
    %777 = vmatprep.subr.bf16.mxu0 0
    %778 = vmatpush1.bf16.msra.mxu0 0
    %779 = vmatprep.subr.bf16.mxu0 0
    %780 = vmatpush1.bf16.msra.mxu0 0
    %781 = vmatprep.subr.bf16.mxu0 0
    %782 = vmatpush1.bf16.msra.mxu0 0
    %783 = vmatprep.subr.bf16.mxu0 0
    %784 = vmatpush1.bf16.msra.mxu0 0
    %785 = vmatprep.subr.bf16.mxu0 0
    %786 = vmatpush1.bf16.msra.mxu0 0
    %787 = vmatprep.subr.bf16.mxu0 0
    %788 = vmatpush1.bf16.msra.mxu0 0
    %789 = vmatprep.subr.bf16.mxu0 %v422
    %790 = vmatpush1.bf16.msra.mxu0 %v419
    %791 = vmatprep.subr.bf16.mxu0 %v305
    %792 = vmatpush1.bf16.msra.mxu0 %v304
    %793 = vmatprep.subr.bf16.mxu0 0
    %794 = vmatpush2.bf16.msra.mxu0 0
    %795 = vmatprep.subr.bf16.mxu0 0
    %796 = vmatpush2.bf16.msra.mxu0 0
    %797 = vmatprep.subr.bf16.mxu0 0
    %798 = vmatpush2.bf16.msra.mxu0 0
    %799 = vmatprep.subr.bf16.mxu0 0
    %800 = vmatpush2.bf16.msra.mxu0 0
    %801 = vmatprep.subr.bf16.mxu0 0
    %802 = vmatpush2.bf16.msra.mxu0 0
    %803 = vmatprep.subr.bf16.mxu0 0
    %804 = vmatpush2.bf16.msra.mxu0 0
    %805 = vmatprep.subr.bf16.mxu0 0
    %806 = vmatpush2.bf16.msra.mxu0 0
    %807 = vmatprep.subr.bf16.mxu0 0
    %808 = vmatpush2.bf16.msra.mxu0 0
    %809 = vmatprep.mubr.bf16.mxu0 0
    %810 = vmatmul.mubr.bf16.gmra.mxu0 %v316
    %v811 = vpop.f32.mrf.mxu0
    %v812 = vadd.f32 %v115, %v811
    %v813 = vpop.f32.mrf.mxu0
    %v814 = vadd.f32 %v119, %v813
    %v815 = vpop.f32.mrf.mxu0
    %v816 = vadd.f32 %v115, %v815
    %v817 = vpop.f32.mrf.mxu0
    %v818 = vadd.f32 %v119, %v817
    %819 = vmatprep.mubr.bf16.mxu0 0
    %820 = vmatmul.mubr.bf16.gmra.mxu0 %v319
    %v821 = vpop.f32.mrf.mxu0
    %v822 = vadd.f32 %v115, %v821
    %v823 = vpop.f32.mrf.mxu0
    %v824 = vadd.f32 %v119, %v823
    %v825 = vpop.f32.mrf.mxu0
    %v826 = vadd.f32 %v115, %v825
    %v827 = vpop.f32.mrf.mxu0
    %v828 = vadd.f32 %v119, %v827
    %829 = vmatprep.mubr.bf16.mxu0 0
    %830 = vmatmul.mubr.bf16.gmra.mxu0 %v322
    %v831 = vpop.f32.mrf.mxu0
    %v832 = vadd.f32 %v115, %v831
    %v833 = vpop.f32.mrf.mxu0
    %v834 = vadd.f32 %v119, %v833
    %v835 = vpop.f32.mrf.mxu0
    %v836 = vadd.f32 %v115, %v835
    %v837 = vpop.f32.mrf.mxu0
    %v838 = vadd.f32 %v119, %v837
    %839 = vmatprep.mubr.bf16.mxu0 0
    %840 = vmatmul.mubr.bf16.gmra.mxu0 %v325
    %v841 = vpop.f32.mrf.mxu0
    %v842 = vadd.f32 %v115, %v841
    %v843 = vpop.f32.mrf.mxu0
    %v844 = vadd.f32 %v119, %v843
    %v845 = vpop.f32.mrf.mxu0
    %v846 = vadd.f32 %v115, %v845
    %v847 = vpop.f32.mrf.mxu0
    %v848 = vadd.f32 %v119, %v847
    %849 = vmatprep.mubr.bf16.mxu0 0
    %850 = vmatmul.mubr.bf16.gmra.mxu0 %v328
    %v851 = vpop.f32.mrf.mxu0
    %v852 = vadd.f32 %v115, %v851
    %v853 = vpop.f32.mrf.mxu0
    %v854 = vadd.f32 %v119, %v853
    %v855 = vpop.f32.mrf.mxu0
    %v856 = vadd.f32 %v115, %v855
    %v857 = vpop.f32.mrf.mxu0
    %v858 = vadd.f32 %v119, %v857
    %859 = vmatprep.mubr.bf16.mxu0 0
    %860 = vmatmul.mubr.bf16.gmra.mxu0 %v331
    %v861 = vpop.f32.mrf.mxu0
    %v862 = vadd.f32 %v115, %v861
    %v863 = vpop.f32.mrf.mxu0
    %v864 = vadd.f32 %v119, %v863
    %v865 = vpop.f32.mrf.mxu0
    %v866 = vadd.f32 %v115, %v865
    %v867 = vpop.f32.mrf.mxu0
    %v868 = vadd.f32 %v119, %v867
    %869 = vmatprep.mubr.bf16.mxu0 0
    %870 = vmatmul.mubr.bf16.gmra.mxu0 %v334
    %v871 = vpop.f32.mrf.mxu0
    %v872 = vadd.f32 %v115, %v871
    %v873 = vpop.f32.mrf.mxu0
    %v874 = vadd.f32 %v119, %v873
    %v875 = vpop.f32.mrf.mxu0
    %v876 = vadd.f32 %v115, %v875
    %v877 = vpop.f32.mrf.mxu0
    %v878 = vadd.f32 %v119, %v877
    %879 = vmatprep.mubr.bf16.mxu0 0
    %880 = vmatmul.mubr.bf16.gmra.mxu0 %v337
    %v881 = vpop.f32.mrf.mxu0
    %v882 = vadd.f32 %v115, %v881
    %v883 = vpop.f32.mrf.mxu0
    %v884 = vadd.f32 %v119, %v883
    %v885 = vpop.f32.mrf.mxu0
    %v886 = vadd.f32 %v115, %v885
    %v887 = vpop.f32.mrf.mxu0
    %v888 = vadd.f32 %v119, %v887
    %889 = vmatprep.mubr.bf16.mxu0 0
    %890 = vmatmul.mubr.bf16.gmra.mxu0 %v340
    %v891 = vpop.f32.mrf.mxu0
    %v892 = vadd.f32 %v115, %v891
    %v893 = vpop.f32.mrf.mxu0
    %v894 = vadd.f32 %v119, %v893
    %v895 = vpop.f32.mrf.mxu0
    %v896 = vadd.f32 %v115, %v895
    %v897 = vpop.f32.mrf.mxu0
    %v898 = vadd.f32 %v119, %v897
    %899 = vmatprep.mubr.bf16.mxu0 0
    %900 = vmatmul.mubr.bf16.gmra.mxu0 %v343
    %v901 = vpop.f32.mrf.mxu0
    %v902 = vadd.f32 %v115, %v901
    %v903 = vpop.f32.mrf.mxu0
    %v904 = vadd.f32 %v119, %v903
    %v905 = vpop.f32.mrf.mxu0
    %v906 = vadd.f32 %v115, %v905
    %v907 = vpop.f32.mrf.mxu0
    %v908 = vadd.f32 %v119, %v907
    %909 = vmatprep.mubr.bf16.mxu0 0
    %910 = vmatmul.mubr.bf16.gmra.mxu0 %v346
    %v911 = vpop.f32.mrf.mxu0
    %v912 = vadd.f32 %v115, %v911
    %v913 = vpop.f32.mrf.mxu0
    %v914 = vadd.f32 %v119, %v913
    %v915 = vpop.f32.mrf.mxu0
    %v916 = vadd.f32 %v115, %v915
    %v917 = vpop.f32.mrf.mxu0
    %v918 = vadd.f32 %v119, %v917
    %919 = vmatprep.mubr.bf16.mxu0 0
    %920 = vmatmul.mubr.bf16.gmra.mxu0 %v349
    %v921 = vpop.f32.mrf.mxu0
    %v922 = vadd.f32 %v115, %v921
    %v923 = vpop.f32.mrf.mxu0
    %v924 = vadd.f32 %v119, %v923
    %v925 = vpop.f32.mrf.mxu0
    %v926 = vadd.f32 %v115, %v925
    %v927 = vpop.f32.mrf.mxu0
    %v928 = vadd.f32 %v119, %v927
    %929 = vmatprep.mubr.bf16.mxu0 0
    %930 = vmatmul.mubr.bf16.gmra.mxu0 %v352
    %v931 = vpop.f32.mrf.mxu0
    %v932 = vadd.f32 %v115, %v931
    %v933 = vpop.f32.mrf.mxu0
    %v934 = vadd.f32 %v119, %v933
    %v935 = vpop.f32.mrf.mxu0
    %v936 = vadd.f32 %v115, %v935
    %v937 = vpop.f32.mrf.mxu0
    %v938 = vadd.f32 %v119, %v937
    %939 = vmatprep.mubr.bf16.mxu0 0
    %940 = vmatmul.mubr.bf16.gmra.mxu0 %v355
    %v941 = vpop.f32.mrf.mxu0
    %v942 = vadd.f32 %v115, %v941
    %v943 = vpop.f32.mrf.mxu0
    %v944 = vadd.f32 %v119, %v943
    %v945 = vpop.f32.mrf.mxu0
    %v946 = vadd.f32 %v115, %v945
    %v947 = vpop.f32.mrf.mxu0
    %v948 = vadd.f32 %v119, %v947
    %949 = vmatprep.mubr.bf16.mxu0 0
    %950 = vmatmul.mubr.bf16.gmra.mxu0 %v358
    %v951 = vpop.f32.mrf.mxu0
    %v952 = vadd.f32 %v115, %v951
    %v953 = vpop.f32.mrf.mxu0
    %v954 = vadd.f32 %v119, %v953
    %v955 = vpop.f32.mrf.mxu0
    %v956 = vadd.f32 %v115, %v955
    %v957 = vpop.f32.mrf.mxu0
    %v958 = vadd.f32 %v119, %v957
    %959 = vmatprep.mubr.bf16.mxu0 0
    %960 = vmatmul.mubr.bf16.gmra.mxu0 %v361
    %v961 = vpop.f32.mrf.mxu0
    %v962 = vadd.f32 %v115, %v961
    %v963 = vpop.f32.mrf.mxu0
    %v964 = vadd.f32 %v119, %v963
    %v965 = vpop.f32.mrf.mxu0
    %v966 = vadd.f32 %v115, %v965
    %v967 = vpop.f32.mrf.mxu0
    %v968 = vadd.f32 %v119, %v967
    %969 = vmatprep.mubr.bf16.mxu0 0
    %970 = vmatmul.mubr.bf16.gmra.mxu0 %v364
    %v971 = vpop.f32.mrf.mxu0
    %v972 = vadd.f32 %v115, %v971
    %v973 = vpop.f32.mrf.mxu0
    %v974 = vadd.f32 %v119, %v973
    %v975 = vpop.f32.mrf.mxu0
    %v976 = vadd.f32 %v115, %v975
    %v977 = vpop.f32.mrf.mxu0
    %v978 = vadd.f32 %v119, %v977
    %979 = vmatprep.mubr.bf16.mxu0 0
    %980 = vmatmul.mubr.bf16.gmra.mxu0 %v367
    %v981 = vpop.f32.mrf.mxu0
    %v982 = vadd.f32 %v115, %v981
    %v983 = vpop.f32.mrf.mxu0
    %v984 = vadd.f32 %v119, %v983
    %v985 = vpop.f32.mrf.mxu0
    %v986 = vadd.f32 %v115, %v985
    %v987 = vpop.f32.mrf.mxu0
    %v988 = vadd.f32 %v119, %v987
    %989 = vmatprep.mubr.bf16.mxu0 0
    %990 = vmatmul.mubr.bf16.gmra.mxu0 %v370
    %v991 = vpop.f32.mrf.mxu0
    %v992 = vadd.f32 %v115, %v991
    %v993 = vpop.f32.mrf.mxu0
    %v994 = vadd.f32 %v119, %v993
    %v995 = vpop.f32.mrf.mxu0
    %v996 = vadd.f32 %v115, %v995
    %v997 = vpop.f32.mrf.mxu0
    %v998 = vadd.f32 %v119, %v997
    %999 = vmatprep.mubr.bf16.mxu0 0
    %1000 = vmatmul.mubr.bf16.gmra.mxu0 %v373
    %v1001 = vpop.f32.mrf.mxu0
    %v1002 = vadd.f32 %v115, %v1001
    %v1003 = vpop.f32.mrf.mxu0
    %v1004 = vadd.f32 %v119, %v1003
    %v1005 = vpop.f32.mrf.mxu0
    %v1006 = vadd.f32 %v115, %v1005
    %v1007 = vpop.f32.mrf.mxu0
    %v1008 = vadd.f32 %v119, %v1007
    %1009 = vmatprep.mubr.bf16.mxu0 0
    %1010 = vmatmul.mubr.bf16.gmra.mxu0 %v376
    %v1011 = vpop.f32.mrf.mxu0
    %v1012 = vadd.f32 %v115, %v1011
    %v1013 = vpop.f32.mrf.mxu0
    %v1014 = vadd.f32 %v119, %v1013
    %v1015 = vpop.f32.mrf.mxu0
    %v1016 = vadd.f32 %v115, %v1015
    %v1017 = vpop.f32.mrf.mxu0
    %v1018 = vadd.f32 %v119, %v1017
    %1019 = vmatprep.mubr.bf16.mxu0 0
    %1020 = vmatmul.mubr.bf16.gmra.mxu0 %v379
    %v1021 = vpop.f32.mrf.mxu0
    %v1022 = vadd.f32 %v115, %v1021
    %v1023 = vpop.f32.mrf.mxu0
    %v1024 = vadd.f32 %v119, %v1023
    %v1025 = vpop.f32.mrf.mxu0
    %v1026 = vadd.f32 %v115, %v1025
    %v1027 = vpop.f32.mrf.mxu0
    %v1028 = vadd.f32 %v119, %v1027
    %1029 = vmatprep.mubr.bf16.mxu0 0
    %1030 = vmatmul.mubr.bf16.gmra.mxu0 %v382
    %v1031 = vpop.f32.mrf.mxu0
    %v1032 = vadd.f32 %v115, %v1031
    %v1033 = vpop.f32.mrf.mxu0
    %v1034 = vadd.f32 %v119, %v1033
    %v1035 = vpop.f32.mrf.mxu0
    %v1036 = vadd.f32 %v115, %v1035
    %v1037 = vpop.f32.mrf.mxu0
    %v1038 = vadd.f32 %v119, %v1037
    %1039 = vmatprep.mubr.bf16.mxu0 0
    %1040 = vmatmul.mubr.bf16.gmra.mxu0 %v385
    %v1041 = vpop.f32.mrf.mxu0
    %v1042 = vadd.f32 %v115, %v1041
    %v1043 = vpop.f32.mrf.mxu0
    %v1044 = vadd.f32 %v119, %v1043
    %v1045 = vpop.f32.mrf.mxu0
    %v1046 = vadd.f32 %v115, %v1045
    %v1047 = vpop.f32.mrf.mxu0
    %v1048 = vadd.f32 %v119, %v1047
    %1049 = vmatprep.mubr.bf16.mxu0 0
    %1050 = vmatmul.mubr.bf16.gmra.mxu0 %v388
    %v1051 = vpop.f32.mrf.mxu0
    %v1052 = vadd.f32 %v115, %v1051
    %v1053 = vpop.f32.mrf.mxu0
    %v1054 = vadd.f32 %v119, %v1053
    %v1055 = vpop.f32.mrf.mxu0
    %v1056 = vadd.f32 %v115, %v1055
    %v1057 = vpop.f32.mrf.mxu0
    %v1058 = vadd.f32 %v119, %v1057
    %1059 = vmatprep.mubr.bf16.mxu0 0
    %1060 = vmatmul.mubr.bf16.gmra.mxu0 %v391
    %v1061 = vpop.f32.mrf.mxu0
    %v1062 = vadd.f32 %v115, %v1061
    %v1063 = vpop.f32.mrf.mxu0
    %v1064 = vadd.f32 %v119, %v1063
    %v1065 = vpop.f32.mrf.mxu0
    %v1066 = vadd.f32 %v115, %v1065
    %v1067 = vpop.f32.mrf.mxu0
    %v1068 = vadd.f32 %v119, %v1067
    %1069 = vmatprep.mubr.bf16.mxu0 0
    %1070 = vmatmul.mubr.bf16.gmra.mxu0 %v394
    %v1071 = vpop.f32.mrf.mxu0
    %v1072 = vadd.f32 %v115, %v1071
    %v1073 = vpop.f32.mrf.mxu0
    %v1074 = vadd.f32 %v119, %v1073
    %v1075 = vpop.f32.mrf.mxu0
    %v1076 = vadd.f32 %v115, %v1075
    %v1077 = vpop.f32.mrf.mxu0
    %v1078 = vadd.f32 %v119, %v1077
    %1079 = vmatprep.mubr.bf16.mxu0 0
    %1080 = vmatmul.mubr.bf16.gmra.mxu0 %v397
    %v1081 = vpop.f32.mrf.mxu0
    %v1082 = vadd.f32 %v115, %v1081
    %v1083 = vpop.f32.mrf.mxu0
    %v1084 = vadd.f32 %v119, %v1083
    %v1085 = vpop.f32.mrf.mxu0
    %v1086 = vadd.f32 %v115, %v1085
    %v1087 = vpop.f32.mrf.mxu0
    %v1088 = vadd.f32 %v119, %v1087
    %1089 = vmatprep.mubr.bf16.mxu0 0
    %1090 = vmatmul.mubr.bf16.gmra.mxu0 %v400
    %v1091 = vpop.f32.mrf.mxu0
    %v1092 = vadd.f32 %v115, %v1091
    %v1093 = vpop.f32.mrf.mxu0
    %v1094 = vadd.f32 %v119, %v1093
    %v1095 = vpop.f32.mrf.mxu0
    %v1096 = vadd.f32 %v115, %v1095
    %v1097 = vpop.f32.mrf.mxu0
    %v1098 = vadd.f32 %v119, %v1097
    %1099 = vmatprep.mubr.bf16.mxu0 0
    %1100 = vmatmul.mubr.bf16.gmra.mxu0 %v403
    %v1101 = vpop.f32.mrf.mxu0
    %v1102 = vadd.f32 %v115, %v1101
    %v1103 = vpop.f32.mrf.mxu0
    %v1104 = vadd.f32 %v119, %v1103
    %v1105 = vpop.f32.mrf.mxu0
    %v1106 = vadd.f32 %v115, %v1105
    %v1107 = vpop.f32.mrf.mxu0
    %v1108 = vadd.f32 %v119, %v1107
    %1109 = vmatprep.mubr.bf16.mxu0 0
    %1110 = vmatmul.mubr.bf16.gmra.mxu0 %v406
    %v1111 = vpop.f32.mrf.mxu0
    %v1112 = vadd.f32 %v115, %v1111
    %v1113 = vpop.f32.mrf.mxu0
    %v1114 = vadd.f32 %v119, %v1113
    %v1115 = vpop.f32.mrf.mxu0
    %v1116 = vadd.f32 %v115, %v1115
    %v1117 = vpop.f32.mrf.mxu0
    %v1118 = vadd.f32 %v119, %v1117
    %1119 = vmatprep.mubr.bf16.mxu0 0
    %1120 = vmatmul.mubr.bf16.gmra.mxu0 %v409
    %v1121 = vpop.f32.mrf.mxu0
    %v1122 = vadd.f32 %v115, %v1121
    %v1123 = vpop.f32.mrf.mxu0
    %v1124 = vadd.f32 %v119, %v1123
    %v1125 = vpop.f32.mrf.mxu0
    %v1126 = vadd.f32 %v115, %v1125
    %v1127 = vpop.f32.mrf.mxu0
    %v1128 = vadd.f32 %v119, %v1127
    %1129 = vdwg.mxu0
    %v1130 = vpack.c.bf16 %v463, %v459
    %v1131 = vpack.c.bf16 %v465, %v461
    %v1132 = vpack.c.bf16 %v816, %v812
    %v1133 = vpack.c.bf16 %v818, %v814
    %v1134 = vpack.c.bf16 %v473, %v469
    %v1135 = vpack.c.bf16 %v475, %v471
    %v1136 = vpack.c.bf16 %v826, %v822
    %v1137 = vpack.c.bf16 %v828, %v824
    %v1138 = vpack.c.bf16 %v483, %v479
    %v1139 = vpack.c.bf16 %v485, %v481
    %v1140 = vpack.c.bf16 %v836, %v832
    %v1141 = vpack.c.bf16 %v838, %v834
    %v1142 = vpack.c.bf16 %v493, %v489
    %v1143 = vpack.c.bf16 %v495, %v491
    %v1144 = vpack.c.bf16 %v846, %v842
    %v1145 = vpack.c.bf16 %v848, %v844
    %v1146 = vpack.c.bf16 %v503, %v499
    %v1147 = vpack.c.bf16 %v505, %v501
    %v1148 = vpack.c.bf16 %v856, %v852
    %v1149 = vpack.c.bf16 %v858, %v854
    %v1150 = vpack.c.bf16 %v513, %v509
    %v1151 = vpack.c.bf16 %v515, %v511
    %v1152 = vpack.c.bf16 %v866, %v862
    %v1153 = vpack.c.bf16 %v868, %v864
    %v1154 = vpack.c.bf16 %v523, %v519
    %v1155 = vpack.c.bf16 %v525, %v521
    %v1156 = vpack.c.bf16 %v876, %v872
    %v1157 = vpack.c.bf16 %v878, %v874
    %v1158 = vpack.c.bf16 %v533, %v529
    %v1159 = vpack.c.bf16 %v535, %v531
    %v1160 = vpack.c.bf16 %v886, %v882
    %v1161 = vpack.c.bf16 %v888, %v884
    %v1162 = vpack.c.bf16 %v543, %v539
    %v1163 = vpack.c.bf16 %v545, %v541
    %v1164 = vpack.c.bf16 %v896, %v892
    %v1165 = vpack.c.bf16 %v898, %v894
    %v1166 = vpack.c.bf16 %v553, %v549
    %v1167 = vpack.c.bf16 %v555, %v551
    %v1168 = vpack.c.bf16 %v906, %v902
    %v1169 = vpack.c.bf16 %v908, %v904
    %v1170 = vpack.c.bf16 %v563, %v559
    %v1171 = vpack.c.bf16 %v565, %v561
    %v1172 = vpack.c.bf16 %v916, %v912
    %v1173 = vpack.c.bf16 %v918, %v914
    %v1174 = vpack.c.bf16 %v573, %v569
    %v1175 = vpack.c.bf16 %v575, %v571
    %v1176 = vpack.c.bf16 %v926, %v922
    %v1177 = vpack.c.bf16 %v928, %v924
    %v1178 = vpack.c.bf16 %v583, %v579
    %v1179 = vpack.c.bf16 %v585, %v581
    %v1180 = vpack.c.bf16 %v936, %v932
    %v1181 = vpack.c.bf16 %v938, %v934
    %v1182 = vpack.c.bf16 %v593, %v589
    %v1183 = vpack.c.bf16 %v595, %v591
    %v1184 = vpack.c.bf16 %v946, %v942
    %v1185 = vpack.c.bf16 %v948, %v944
    %v1186 = vpack.c.bf16 %v603, %v599
    %v1187 = vpack.c.bf16 %v605, %v601
    %v1188 = vpack.c.bf16 %v956, %v952
    %v1189 = vpack.c.bf16 %v958, %v954
    %v1190 = vpack.c.bf16 %v613, %v609
    %v1191 = vpack.c.bf16 %v615, %v611
    %v1192 = vpack.c.bf16 %v966, %v962
    %v1193 = vpack.c.bf16 %v968, %v964
    %v1194 = vpack.c.bf16 %v623, %v619
    %v1195 = vpack.c.bf16 %v625, %v621
    %v1196 = vpack.c.bf16 %v976, %v972
    %v1197 = vpack.c.bf16 %v978, %v974
    %v1198 = vpack.c.bf16 %v633, %v629
    %v1199 = vpack.c.bf16 %v635, %v631
    %v1200 = vpack.c.bf16 %v986, %v982
    %v1201 = vpack.c.bf16 %v988, %v984
    %v1202 = vpack.c.bf16 %v643, %v639
    %v1203 = vpack.c.bf16 %v645, %v641
    %v1204 = vpack.c.bf16 %v996, %v992
    %v1205 = vpack.c.bf16 %v998, %v994
    %v1206 = vpack.c.bf16 %v653, %v649
    %v1207 = vpack.c.bf16 %v655, %v651
    %v1208 = vpack.c.bf16 %v1006, %v1002
    %v1209 = vpack.c.bf16 %v1008, %v1004
    %v1210 = vpack.c.bf16 %v663, %v659
    %v1211 = vpack.c.bf16 %v665, %v661
    %v1212 = vpack.c.bf16 %v1016, %v1012
    %v1213 = vpack.c.bf16 %v1018, %v1014
    %v1214 = vpack.c.bf16 %v673, %v669
    %v1215 = vpack.c.bf16 %v675, %v671
    %v1216 = vpack.c.bf16 %v1026, %v1022
    %v1217 = vpack.c.bf16 %v1028, %v1024
    %v1218 = vpack.c.bf16 %v683, %v679
    %v1219 = vpack.c.bf16 %v685, %v681
    %v1220 = vpack.c.bf16 %v1036, %v1032
    %v1221 = vpack.c.bf16 %v1038, %v1034
    %v1222 = vpack.c.bf16 %v693, %v689
    %v1223 = vpack.c.bf16 %v695, %v691
    %v1224 = vpack.c.bf16 %v1046, %v1042
    %v1225 = vpack.c.bf16 %v1048, %v1044
    %v1226 = vpack.c.bf16 %v703, %v699
    %v1227 = vpack.c.bf16 %v705, %v701
    %v1228 = vpack.c.bf16 %v1056, %v1052
    %v1229 = vpack.c.bf16 %v1058, %v1054
    %v1230 = vpack.c.bf16 %v713, %v709
    %v1231 = vpack.c.bf16 %v715, %v711
    %v1232 = vpack.c.bf16 %v1066, %v1062
    %v1233 = vpack.c.bf16 %v1068, %v1064
    %v1234 = vpack.c.bf16 %v723, %v719
    %v1235 = vpack.c.bf16 %v725, %v721
    %v1236 = vpack.c.bf16 %v1076, %v1072
    %v1237 = vpack.c.bf16 %v1078, %v1074
    %v1238 = vpack.c.bf16 %v733, %v729
    %v1239 = vpack.c.bf16 %v735, %v731
    %v1240 = vpack.c.bf16 %v1086, %v1082
    %v1241 = vpack.c.bf16 %v1088, %v1084
    %v1242 = vpack.c.bf16 %v743, %v739
    %v1243 = vpack.c.bf16 %v745, %v741
    %v1244 = vpack.c.bf16 %v1096, %v1092
    %v1245 = vpack.c.bf16 %v1098, %v1094
    %v1246 = vpack.c.bf16 %v753, %v749
    %v1247 = vpack.c.bf16 %v755, %v751
    %v1248 = vpack.c.bf16 %v1106, %v1102
    %v1249 = vpack.c.bf16 %v1108, %v1104
    %v1250 = vpack.c.bf16 %v763, %v759
    %v1251 = vpack.c.bf16 %v765, %v761
    %v1252 = vpack.c.bf16 %v1116, %v1112
    %v1253 = vpack.c.bf16 %v1118, %v1114
    %v1254 = vpack.c.bf16 %v773, %v769
    %v1255 = vpack.c.bf16 %v775, %v771
    %v1256 = vpack.c.bf16 %v1126, %v1122
    %v1257 = vpack.c.bf16 %v1128, %v1124
    %v1386 = vunpack.c.l.b16 %v1130
    %v1387 = vunpack.c.l.b16 %v1131
    %v1388 = vunpack.c.l.b16 %v1132
    %v1389 = vunpack.c.l.b16 %v1133
    %v1390 = vunpack.c.h.b16 %v1130
    %v1391 = vunpack.c.h.b16 %v1131
    %v1392 = vunpack.c.h.b16 %v1132
    %v1393 = vunpack.c.h.b16 %v1133
    %v1394 = vunpack.c.l.b16 %v1134
    %v1395 = vunpack.c.l.b16 %v1135
    %v1396 = vunpack.c.l.b16 %v1136
    %v1397 = vunpack.c.l.b16 %v1137
    %v1398 = vunpack.c.h.b16 %v1134
    %v1399 = vunpack.c.h.b16 %v1135
    %v1400 = vunpack.c.h.b16 %v1136
    %v1401 = vunpack.c.h.b16 %v1137
    %v1402 = vunpack.c.l.b16 %v1138
    %v1403 = vunpack.c.l.b16 %v1139
    %v1404 = vunpack.c.l.b16 %v1140
    %v1405 = vunpack.c.l.b16 %v1141
    %v1406 = vunpack.c.h.b16 %v1138
    %v1407 = vunpack.c.h.b16 %v1139
    %v1408 = vunpack.c.h.b16 %v1140
    %v1409 = vunpack.c.h.b16 %v1141
    %v1410 = vunpack.c.l.b16 %v1142
    %v1411 = vunpack.c.l.b16 %v1143
    %v1412 = vunpack.c.l.b16 %v1144
    %v1413 = vunpack.c.l.b16 %v1145
    %v1414 = vunpack.c.h.b16 %v1142
    %v1415 = vunpack.c.h.b16 %v1143
    %v1416 = vunpack.c.h.b16 %v1144
    %v1417 = vunpack.c.h.b16 %v1145
    %v1418 = vunpack.c.l.b16 %v1146
    %v1419 = vunpack.c.l.b16 %v1147
    %v1420 = vunpack.c.l.b16 %v1148
    %v1421 = vunpack.c.l.b16 %v1149
    %v1422 = vunpack.c.h.b16 %v1146
    %v1423 = vunpack.c.h.b16 %v1147
    %v1424 = vunpack.c.h.b16 %v1148
    %v1425 = vunpack.c.h.b16 %v1149
    %v1426 = vunpack.c.l.b16 %v1150
    %v1427 = vunpack.c.l.b16 %v1151
    %v1428 = vunpack.c.l.b16 %v1152
    %v1429 = vunpack.c.l.b16 %v1153
    %v1430 = vunpack.c.h.b16 %v1150
    %v1431 = vunpack.c.h.b16 %v1151
    %v1432 = vunpack.c.h.b16 %v1152
    %v1433 = vunpack.c.h.b16 %v1153
    %v1434 = vunpack.c.l.b16 %v1154
    %v1435 = vunpack.c.l.b16 %v1155
    %v1436 = vunpack.c.l.b16 %v1156
    %v1437 = vunpack.c.l.b16 %v1157
    %v1438 = vunpack.c.h.b16 %v1154
    %v1439 = vunpack.c.h.b16 %v1155
    %v1440 = vunpack.c.h.b16 %v1156
    %v1441 = vunpack.c.h.b16 %v1157
    %v1442 = vunpack.c.l.b16 %v1158
    %v1443 = vunpack.c.l.b16 %v1159
    %v1444 = vunpack.c.l.b16 %v1160
    %v1445 = vunpack.c.l.b16 %v1161
    %v1446 = vunpack.c.h.b16 %v1158
    %v1447 = vunpack.c.h.b16 %v1159
    %v1448 = vunpack.c.h.b16 %v1160
    %v1449 = vunpack.c.h.b16 %v1161
    %v1450 = vunpack.c.l.b16 %v1162
    %v1451 = vunpack.c.l.b16 %v1163
    %v1452 = vunpack.c.l.b16 %v1164
    %v1453 = vunpack.c.l.b16 %v1165
    %v1454 = vunpack.c.h.b16 %v1162
    %v1455 = vunpack.c.h.b16 %v1163
    %v1456 = vunpack.c.h.b16 %v1164
    %v1457 = vunpack.c.h.b16 %v1165
    %v1458 = vunpack.c.l.b16 %v1166
    %v1459 = vunpack.c.l.b16 %v1167
    %v1460 = vunpack.c.l.b16 %v1168
    %v1461 = vunpack.c.l.b16 %v1169
    %v1462 = vunpack.c.h.b16 %v1166
    %v1463 = vunpack.c.h.b16 %v1167
    %v1464 = vunpack.c.h.b16 %v1168
    %v1465 = vunpack.c.h.b16 %v1169
    %v1466 = vunpack.c.l.b16 %v1170
    %v1467 = vunpack.c.l.b16 %v1171
    %v1468 = vunpack.c.l.b16 %v1172
    %v1469 = vunpack.c.l.b16 %v1173
    %v1470 = vunpack.c.h.b16 %v1170
    %v1471 = vunpack.c.h.b16 %v1171
    %v1472 = vunpack.c.h.b16 %v1172
    %v1473 = vunpack.c.h.b16 %v1173
    %v1474 = vunpack.c.l.b16 %v1174
    %v1475 = vunpack.c.l.b16 %v1175
    %v1476 = vunpack.c.l.b16 %v1176
    %v1477 = vunpack.c.l.b16 %v1177
    %v1478 = vunpack.c.h.b16 %v1174
    %v1479 = vunpack.c.h.b16 %v1175
    %v1480 = vunpack.c.h.b16 %v1176
    %v1481 = vunpack.c.h.b16 %v1177
    %v1482 = vunpack.c.l.b16 %v1178
    %v1483 = vunpack.c.l.b16 %v1179
    %v1484 = vunpack.c.l.b16 %v1180
    %v1485 = vunpack.c.l.b16 %v1181
    %v1486 = vunpack.c.h.b16 %v1178
    %v1487 = vunpack.c.h.b16 %v1179
    %v1488 = vunpack.c.h.b16 %v1180
    %v1489 = vunpack.c.h.b16 %v1181
    %v1490 = vunpack.c.l.b16 %v1182
    %v1491 = vunpack.c.l.b16 %v1183
    %v1492 = vunpack.c.l.b16 %v1184
    %v1493 = vunpack.c.l.b16 %v1185
    %v1494 = vunpack.c.h.b16 %v1182
    %v1495 = vunpack.c.h.b16 %v1183
    %v1496 = vunpack.c.h.b16 %v1184
    %v1497 = vunpack.c.h.b16 %v1185
    %v1498 = vunpack.c.l.b16 %v1186
    %v1499 = vunpack.c.l.b16 %v1187
    %v1500 = vunpack.c.l.b16 %v1188
    %v1501 = vunpack.c.l.b16 %v1189
    %v1502 = vunpack.c.h.b16 %v1186
    %v1503 = vunpack.c.h.b16 %v1187
    %v1504 = vunpack.c.h.b16 %v1188
    %v1505 = vunpack.c.h.b16 %v1189
    %v1506 = vunpack.c.l.b16 %v1190
    %v1507 = vunpack.c.l.b16 %v1191
    %v1508 = vunpack.c.l.b16 %v1192
    %v1509 = vunpack.c.l.b16 %v1193
    %v1510 = vunpack.c.h.b16 %v1190
    %v1511 = vunpack.c.h.b16 %v1191
    %v1512 = vunpack.c.h.b16 %v1192
    %v1513 = vunpack.c.h.b16 %v1193
    %v1514 = vunpack.c.l.b16 %v1194
    %v1515 = vunpack.c.l.b16 %v1195
    %v1516 = vunpack.c.l.b16 %v1196
    %v1517 = vunpack.c.l.b16 %v1197
    %v1518 = vunpack.c.h.b16 %v1194
    %v1519 = vunpack.c.h.b16 %v1195
    %v1520 = vunpack.c.h.b16 %v1196
    %v1521 = vunpack.c.h.b16 %v1197
    %v1522 = vunpack.c.l.b16 %v1198
    %v1523 = vunpack.c.l.b16 %v1199
    %v1524 = vunpack.c.l.b16 %v1200
    %v1525 = vunpack.c.l.b16 %v1201
    %v1526 = vunpack.c.h.b16 %v1198
    %v1527 = vunpack.c.h.b16 %v1199
    %v1528 = vunpack.c.h.b16 %v1200
    %v1529 = vunpack.c.h.b16 %v1201
    %v1530 = vunpack.c.l.b16 %v1202
    %v1531 = vunpack.c.l.b16 %v1203
    %v1532 = vunpack.c.l.b16 %v1204
    %v1533 = vunpack.c.l.b16 %v1205
    %v1534 = vunpack.c.h.b16 %v1202
    %v1535 = vunpack.c.h.b16 %v1203
    %v1536 = vunpack.c.h.b16 %v1204
    %v1537 = vunpack.c.h.b16 %v1205
    %v1538 = vunpack.c.l.b16 %v1206
    %v1539 = vunpack.c.l.b16 %v1207
    %v1540 = vunpack.c.l.b16 %v1208
    %v1541 = vunpack.c.l.b16 %v1209
    %v1542 = vunpack.c.h.b16 %v1206
    %v1543 = vunpack.c.h.b16 %v1207
    %v1544 = vunpack.c.h.b16 %v1208
    %v1545 = vunpack.c.h.b16 %v1209
    %v1546 = vunpack.c.l.b16 %v1210
    %v1547 = vunpack.c.l.b16 %v1211
    %v1548 = vunpack.c.l.b16 %v1212
    %v1549 = vunpack.c.l.b16 %v1213
    %v1550 = vunpack.c.h.b16 %v1210
    %v1551 = vunpack.c.h.b16 %v1211
    %v1552 = vunpack.c.h.b16 %v1212
    %v1553 = vunpack.c.h.b16 %v1213
    %v1554 = vunpack.c.l.b16 %v1214
    %v1555 = vunpack.c.l.b16 %v1215
    %v1556 = vunpack.c.l.b16 %v1216
    %v1557 = vunpack.c.l.b16 %v1217
    %v1558 = vunpack.c.h.b16 %v1214
    %v1559 = vunpack.c.h.b16 %v1215
    %v1560 = vunpack.c.h.b16 %v1216
    %v1561 = vunpack.c.h.b16 %v1217
    %v1562 = vunpack.c.l.b16 %v1218
    %v1563 = vunpack.c.l.b16 %v1219
    %v1564 = vunpack.c.l.b16 %v1220
    %v1565 = vunpack.c.l.b16 %v1221
    %v1566 = vunpack.c.h.b16 %v1218
    %v1567 = vunpack.c.h.b16 %v1219
    %v1568 = vunpack.c.h.b16 %v1220
    %v1569 = vunpack.c.h.b16 %v1221
    %v1570 = vunpack.c.l.b16 %v1222
    %v1571 = vunpack.c.l.b16 %v1223
    %v1572 = vunpack.c.l.b16 %v1224
    %v1573 = vunpack.c.l.b16 %v1225
    %v1574 = vunpack.c.h.b16 %v1222
    %v1575 = vunpack.c.h.b16 %v1223
    %v1576 = vunpack.c.h.b16 %v1224
    %v1577 = vunpack.c.h.b16 %v1225
    %v1578 = vunpack.c.l.b16 %v1226
    %v1579 = vunpack.c.l.b16 %v1227
    %v1580 = vunpack.c.l.b16 %v1228
    %v1581 = vunpack.c.l.b16 %v1229
    %v1582 = vunpack.c.h.b16 %v1226
    %v1583 = vunpack.c.h.b16 %v1227
    %v1584 = vunpack.c.h.b16 %v1228
    %v1585 = vunpack.c.h.b16 %v1229
    %v1586 = vunpack.c.l.b16 %v1230
    %v1587 = vunpack.c.l.b16 %v1231
    %v1588 = vunpack.c.l.b16 %v1232
    %v1589 = vunpack.c.l.b16 %v1233
    %v1590 = vunpack.c.h.b16 %v1230
    %v1591 = vunpack.c.h.b16 %v1231
    %v1592 = vunpack.c.h.b16 %v1232
    %v1593 = vunpack.c.h.b16 %v1233
    %v1594 = vunpack.c.l.b16 %v1234
    %v1595 = vunpack.c.l.b16 %v1235
    %v1596 = vunpack.c.l.b16 %v1236
    %v1597 = vunpack.c.l.b16 %v1237
    %v1598 = vunpack.c.h.b16 %v1234
    %v1599 = vunpack.c.h.b16 %v1235
    %v1600 = vunpack.c.h.b16 %v1236
    %v1601 = vunpack.c.h.b16 %v1237
    %v1602 = vunpack.c.l.b16 %v1238
    %v1603 = vunpack.c.l.b16 %v1239
    %v1604 = vunpack.c.l.b16 %v1240
    %v1605 = vunpack.c.l.b16 %v1241
    %v1606 = vunpack.c.h.b16 %v1238
    %v1607 = vunpack.c.h.b16 %v1239
    %v1608 = vunpack.c.h.b16 %v1240
    %v1609 = vunpack.c.h.b16 %v1241
    %v1610 = vunpack.c.l.b16 %v1242
    %v1611 = vunpack.c.l.b16 %v1243
    %v1612 = vunpack.c.l.b16 %v1244
    %v1613 = vunpack.c.l.b16 %v1245
    %v1614 = vunpack.c.h.b16 %v1242
    %v1615 = vunpack.c.h.b16 %v1243
    %v1616 = vunpack.c.h.b16 %v1244
    %v1617 = vunpack.c.h.b16 %v1245
    %v1618 = vunpack.c.l.b16 %v1246
    %v1619 = vunpack.c.l.b16 %v1247
    %v1620 = vunpack.c.l.b16 %v1248
    %v1621 = vunpack.c.l.b16 %v1249
    %v1622 = vunpack.c.h.b16 %v1246
    %v1623 = vunpack.c.h.b16 %v1247
    %v1624 = vunpack.c.h.b16 %v1248
    %v1625 = vunpack.c.h.b16 %v1249
    %v1626 = vunpack.c.l.b16 %v1250
    %v1627 = vunpack.c.l.b16 %v1251
    %v1628 = vunpack.c.l.b16 %v1252
    %v1629 = vunpack.c.l.b16 %v1253
    %v1630 = vunpack.c.h.b16 %v1250
    %v1631 = vunpack.c.h.b16 %v1251
    %v1632 = vunpack.c.h.b16 %v1252
    %v1633 = vunpack.c.h.b16 %v1253
    %v1634 = vunpack.c.l.b16 %v1254
    %v1635 = vunpack.c.l.b16 %v1255
    %v1636 = vunpack.c.l.b16 %v1256
    %v1637 = vunpack.c.l.b16 %v1257
    %v1638 = vunpack.c.h.b16 %v1254
    %v1639 = vunpack.c.h.b16 %v1255
    %v1640 = vunpack.c.h.b16 %v1256
    %v1641 = vunpack.c.h.b16 %v1257
    %v1642 = vpack.c.b16 %v1387, %v1386
    %v1643 = vpack.c.b16 %v1389, %v1388
    %v1644 = vpack.c.b16 %v1391, %v1390
    %v1645 = vpack.c.b16 %v1393, %v1392
    %v1646 = vpack.c.b16 %v1395, %v1394
    %v1647 = vpack.c.b16 %v1397, %v1396
    %v1648 = vpack.c.b16 %v1399, %v1398
    %v1649 = vpack.c.b16 %v1401, %v1400
    %v1650 = vpack.c.b16 %v1403, %v1402
    %v1651 = vpack.c.b16 %v1405, %v1404
    %v1652 = vpack.c.b16 %v1407, %v1406
    %v1653 = vpack.c.b16 %v1409, %v1408
    %v1654 = vpack.c.b16 %v1411, %v1410
    %v1655 = vpack.c.b16 %v1413, %v1412
    %v1656 = vpack.c.b16 %v1415, %v1414
    %v1657 = vpack.c.b16 %v1417, %v1416
    %v1658 = vpack.c.b16 %v1419, %v1418
    %v1659 = vpack.c.b16 %v1421, %v1420
    %v1660 = vpack.c.b16 %v1423, %v1422
    %v1661 = vpack.c.b16 %v1425, %v1424
    %v1662 = vpack.c.b16 %v1427, %v1426
    %v1663 = vpack.c.b16 %v1429, %v1428
    %v1664 = vpack.c.b16 %v1431, %v1430
    %v1665 = vpack.c.b16 %v1433, %v1432
    %v1666 = vpack.c.b16 %v1435, %v1434
    %v1667 = vpack.c.b16 %v1437, %v1436
    %v1668 = vpack.c.b16 %v1439, %v1438
    %v1669 = vpack.c.b16 %v1441, %v1440
    %v1670 = vpack.c.b16 %v1443, %v1442
    %v1671 = vpack.c.b16 %v1445, %v1444
    %v1672 = vpack.c.b16 %v1447, %v1446
    %v1673 = vpack.c.b16 %v1449, %v1448
    %v1674 = vpack.c.b16 %v1451, %v1450
    %v1675 = vpack.c.b16 %v1453, %v1452
    %v1676 = vpack.c.b16 %v1455, %v1454
    %v1677 = vpack.c.b16 %v1457, %v1456
    %v1678 = vpack.c.b16 %v1459, %v1458
    %v1679 = vpack.c.b16 %v1461, %v1460
    %v1680 = vpack.c.b16 %v1463, %v1462
    %v1681 = vpack.c.b16 %v1465, %v1464
    %v1682 = vpack.c.b16 %v1467, %v1466
    %v1683 = vpack.c.b16 %v1469, %v1468
    %v1684 = vpack.c.b16 %v1471, %v1470
    %v1685 = vpack.c.b16 %v1473, %v1472
    %v1686 = vpack.c.b16 %v1475, %v1474
    %v1687 = vpack.c.b16 %v1477, %v1476
    %v1688 = vpack.c.b16 %v1479, %v1478
    %v1689 = vpack.c.b16 %v1481, %v1480
    %v1690 = vpack.c.b16 %v1483, %v1482
    %v1691 = vpack.c.b16 %v1485, %v1484
    %v1692 = vpack.c.b16 %v1487, %v1486
    %v1693 = vpack.c.b16 %v1489, %v1488
    %v1694 = vpack.c.b16 %v1491, %v1490
    %v1695 = vpack.c.b16 %v1493, %v1492
    %v1696 = vpack.c.b16 %v1495, %v1494
    %v1697 = vpack.c.b16 %v1497, %v1496
    %v1698 = vpack.c.b16 %v1499, %v1498
    %v1699 = vpack.c.b16 %v1501, %v1500
    %v1700 = vpack.c.b16 %v1503, %v1502
    %v1701 = vpack.c.b16 %v1505, %v1504
    %v1702 = vpack.c.b16 %v1507, %v1506
    %v1703 = vpack.c.b16 %v1509, %v1508
    %v1704 = vpack.c.b16 %v1511, %v1510
    %v1705 = vpack.c.b16 %v1513, %v1512
    %v1706 = vpack.c.b16 %v1515, %v1514
    %v1707 = vpack.c.b16 %v1517, %v1516
    %v1708 = vpack.c.b16 %v1519, %v1518
    %v1709 = vpack.c.b16 %v1521, %v1520
    %v1710 = vpack.c.b16 %v1523, %v1522
    %v1711 = vpack.c.b16 %v1525, %v1524
    %v1712 = vpack.c.b16 %v1527, %v1526
    %v1713 = vpack.c.b16 %v1529, %v1528
    %v1714 = vpack.c.b16 %v1531, %v1530
    %v1715 = vpack.c.b16 %v1533, %v1532
    %v1716 = vpack.c.b16 %v1535, %v1534
    %v1717 = vpack.c.b16 %v1537, %v1536
    %v1718 = vpack.c.b16 %v1539, %v1538
    %v1719 = vpack.c.b16 %v1541, %v1540
    %v1720 = vpack.c.b16 %v1543, %v1542
    %v1721 = vpack.c.b16 %v1545, %v1544
    %v1722 = vpack.c.b16 %v1547, %v1546
    %v1723 = vpack.c.b16 %v1549, %v1548
    %v1724 = vpack.c.b16 %v1551, %v1550
    %v1725 = vpack.c.b16 %v1553, %v1552
    %v1726 = vpack.c.b16 %v1555, %v1554
    %v1727 = vpack.c.b16 %v1557, %v1556
    %v1728 = vpack.c.b16 %v1559, %v1558
    %v1729 = vpack.c.b16 %v1561, %v1560
    %v1730 = vpack.c.b16 %v1563, %v1562
    %v1731 = vpack.c.b16 %v1565, %v1564
    %v1732 = vpack.c.b16 %v1567, %v1566
    %v1733 = vpack.c.b16 %v1569, %v1568
    %v1734 = vpack.c.b16 %v1571, %v1570
    %v1735 = vpack.c.b16 %v1573, %v1572
    %v1736 = vpack.c.b16 %v1575, %v1574
    %v1737 = vpack.c.b16 %v1577, %v1576
    %v1738 = vpack.c.b16 %v1579, %v1578
    %v1739 = vpack.c.b16 %v1581, %v1580
    %v1740 = vpack.c.b16 %v1583, %v1582
    %v1741 = vpack.c.b16 %v1585, %v1584
    %v1742 = vpack.c.b16 %v1587, %v1586
    %v1743 = vpack.c.b16 %v1589, %v1588
    %v1744 = vpack.c.b16 %v1591, %v1590
    %v1745 = vpack.c.b16 %v1593, %v1592
    %v1746 = vpack.c.b16 %v1595, %v1594
    %v1747 = vpack.c.b16 %v1597, %v1596
    %v1748 = vpack.c.b16 %v1599, %v1598
    %v1749 = vpack.c.b16 %v1601, %v1600
    %v1750 = vpack.c.b16 %v1603, %v1602
    %v1751 = vpack.c.b16 %v1605, %v1604
    %v1752 = vpack.c.b16 %v1607, %v1606
    %v1753 = vpack.c.b16 %v1609, %v1608
    %v1754 = vpack.c.b16 %v1611, %v1610
    %v1755 = vpack.c.b16 %v1613, %v1612
    %v1756 = vpack.c.b16 %v1615, %v1614
    %v1757 = vpack.c.b16 %v1617, %v1616
    %v1758 = vpack.c.b16 %v1619, %v1618
    %v1759 = vpack.c.b16 %v1621, %v1620
    %v1760 = vpack.c.b16 %v1623, %v1622
    %v1761 = vpack.c.b16 %v1625, %v1624
    %v1762 = vpack.c.b16 %v1627, %v1626
    %v1763 = vpack.c.b16 %v1629, %v1628
    %v1764 = vpack.c.b16 %v1631, %v1630
    %v1765 = vpack.c.b16 %v1633, %v1632
    %v1766 = vpack.c.b16 %v1635, %v1634
    %v1767 = vpack.c.b16 %v1637, %v1636
    %v1768 = vpack.c.b16 %v1639, %v1638
    %v1769 = vpack.c.b16 %v1641, %v1640
    %1898 = vst [vmem:[#allocation2] sm:$0xff] %v1642
    %1899 = vst [vmem:[#allocation2 + $0x8] sm:$0xff] %v1643
    %1900 = vst [vmem:[#allocation2 + $0x10] sm:$0xff] %v1644
    %1901 = vst [vmem:[#allocation2 + $0x18] sm:$0xff] %v1645
    %1902 = vst [vmem:[#allocation2 + $0x20] sm:$0xff] %v1646
    %1903 = vst [vmem:[#allocation2 + $0x28] sm:$0xff] %v1647
    %1904 = vst [vmem:[#allocation2 + $0x30] sm:$0xff] %v1648
    %1905 = vst [vmem:[#allocation2 + $0x38] sm:$0xff] %v1649
    %1906 = vst [vmem:[#allocation2 + $0x40] sm:$0xff] %v1650
    %1907 = vst [vmem:[#allocation2 + $0x48] sm:$0xff] %v1651
    %1908 = vst [vmem:[#allocation2 + $0x50] sm:$0xff] %v1652
    %1909 = vst [vmem:[#allocation2 + $0x58] sm:$0xff] %v1653
    %1910 = vst [vmem:[#allocation2 + $0x60] sm:$0xff] %v1654
    %1911 = vst [vmem:[#allocation2 + $0x68] sm:$0xff] %v1655
    %1912 = vst [vmem:[#allocation2 + $0x70] sm:$0xff] %v1656
    %1913 = vst [vmem:[#allocation2 + $0x78] sm:$0xff] %v1657
    %1914 = vst [vmem:[#allocation2 + $0x80] sm:$0xff] %v1658
    %1915 = vst [vmem:[#allocation2 + $0x88] sm:$0xff] %v1659
    %1916 = vst [vmem:[#allocation2 + $0x90] sm:$0xff] %v1660
    %1917 = vst [vmem:[#allocation2 + $0x98] sm:$0xff] %v1661
    %1918 = vst [vmem:[#allocation2 + $0xa0] sm:$0xff] %v1662
    %1919 = vst [vmem:[#allocation2 + $0xa8] sm:$0xff] %v1663
    %1920 = vst [vmem:[#allocation2 + $0xb0] sm:$0xff] %v1664
    %1921 = vst [vmem:[#allocation2 + $0xb8] sm:$0xff] %v1665
    %1922 = vst [vmem:[#allocation2 + $0xc0] sm:$0xff] %v1666
    %1923 = vst [vmem:[#allocation2 + $0xc8] sm:$0xff] %v1667
    %1924 = vst [vmem:[#allocation2 + $0xd0] sm:$0xff] %v1668
    %1925 = vst [vmem:[#allocation2 + $0xd8] sm:$0xff] %v1669
    %1926 = vst [vmem:[#allocation2 + $0xe0] sm:$0xff] %v1670
    %1927 = vst [vmem:[#allocation2 + $0xe8] sm:$0xff] %v1671
    %1928 = vst [vmem:[#allocation2 + $0xf0] sm:$0xff] %v1672
    %1929 = vst [vmem:[#allocation2 + $0xf8] sm:$0xff] %v1673
    %1930 = vst [vmem:[#allocation2 + $0x100] sm:$0xff] %v1674
    %1931 = vst [vmem:[#allocation2 + $0x108] sm:$0xff] %v1675
    %1932 = vst [vmem:[#allocation2 + $0x110] sm:$0xff] %v1676
    %1933 = vst [vmem:[#allocation2 + $0x118] sm:$0xff] %v1677
    %1934 = vst [vmem:[#allocation2 + $0x120] sm:$0xff] %v1678
    %1935 = vst [vmem:[#allocation2 + $0x128] sm:$0xff] %v1679
    %1936 = vst [vmem:[#allocation2 + $0x130] sm:$0xff] %v1680
    %1937 = vst [vmem:[#allocation2 + $0x138] sm:$0xff] %v1681
    %1938 = vst [vmem:[#allocation2 + $0x140] sm:$0xff] %v1682
    %1939 = vst [vmem:[#allocation2 + $0x148] sm:$0xff] %v1683
    %1940 = vst [vmem:[#allocation2 + $0x150] sm:$0xff] %v1684
    %1941 = vst [vmem:[#allocation2 + $0x158] sm:$0xff] %v1685
    %1942 = vst [vmem:[#allocation2 + $0x160] sm:$0xff] %v1686
    %1943 = vst [vmem:[#allocation2 + $0x168] sm:$0xff] %v1687
    %1944 = vst [vmem:[#allocation2 + $0x170] sm:$0xff] %v1688
    %1945 = vst [vmem:[#allocation2 + $0x178] sm:$0xff] %v1689
    %1946 = vst [vmem:[#allocation2 + $0x180] sm:$0xff] %v1690
    %1947 = vst [vmem:[#allocation2 + $0x188] sm:$0xff] %v1691
    %1948 = vst [vmem:[#allocation2 + $0x190] sm:$0xff] %v1692
    %1949 = vst [vmem:[#allocation2 + $0x198] sm:$0xff] %v1693
    %1950 = vst [vmem:[#allocation2 + $0x1a0] sm:$0xff] %v1694
    %1951 = vst [vmem:[#allocation2 + $0x1a8] sm:$0xff] %v1695
    %1952 = vst [vmem:[#allocation2 + $0x1b0] sm:$0xff] %v1696
    %1953 = vst [vmem:[#allocation2 + $0x1b8] sm:$0xff] %v1697
    %1954 = vst [vmem:[#allocation2 + $0x1c0] sm:$0xff] %v1698
    %1955 = vst [vmem:[#allocation2 + $0x1c8] sm:$0xff] %v1699
    %1956 = vst [vmem:[#allocation2 + $0x1d0] sm:$0xff] %v1700
    %1957 = vst [vmem:[#allocation2 + $0x1d8] sm:$0xff] %v1701
    %1958 = vst [vmem:[#allocation2 + $0x1e0] sm:$0xff] %v1702
    %1959 = vst [vmem:[#allocation2 + $0x1e8] sm:$0xff] %v1703
    %1960 = vst [vmem:[#allocation2 + $0x1f0] sm:$0xff] %v1704
    %1961 = vst [vmem:[#allocation2 + $0x1f8] sm:$0xff] %v1705
    %1962 = vst [vmem:[#allocation2 + $0x200] sm:$0xff] %v1706
    %1963 = vst [vmem:[#allocation2 + $0x208] sm:$0xff] %v1707
    %1964 = vst [vmem:[#allocation2 + $0x210] sm:$0xff] %v1708
    %1965 = vst [vmem:[#allocation2 + $0x218] sm:$0xff] %v1709
    %1966 = vst [vmem:[#allocation2 + $0x220] sm:$0xff] %v1710
    %1967 = vst [vmem:[#allocation2 + $0x228] sm:$0xff] %v1711
    %1968 = vst [vmem:[#allocation2 + $0x230] sm:$0xff] %v1712
    %1969 = vst [vmem:[#allocation2 + $0x238] sm:$0xff] %v1713
    %1970 = vst [vmem:[#allocation2 + $0x240] sm:$0xff] %v1714
    %1971 = vst [vmem:[#allocation2 + $0x248] sm:$0xff] %v1715
    %1972 = vst [vmem:[#allocation2 + $0x250] sm:$0xff] %v1716
    %1973 = vst [vmem:[#allocation2 + $0x258] sm:$0xff] %v1717
    %1974 = vst [vmem:[#allocation2 + $0x260] sm:$0xff] %v1718
    %1975 = vst [vmem:[#allocation2 + $0x268] sm:$0xff] %v1719
    %1976 = vst [vmem:[#allocation2 + $0x270] sm:$0xff] %v1720
    %1977 = vst [vmem:[#allocation2 + $0x278] sm:$0xff] %v1721
    %1978 = vst [vmem:[#allocation2 + $0x280] sm:$0xff] %v1722
    %1979 = vst [vmem:[#allocation2 + $0x288] sm:$0xff] %v1723
    %1980 = vst [vmem:[#allocation2 + $0x290] sm:$0xff] %v1724
    %1981 = vst [vmem:[#allocation2 + $0x298] sm:$0xff] %v1725
    %1982 = vst [vmem:[#allocation2 + $0x2a0] sm:$0xff] %v1726
    %1983 = vst [vmem:[#allocation2 + $0x2a8] sm:$0xff] %v1727
    %1984 = vst [vmem:[#allocation2 + $0x2b0] sm:$0xff] %v1728
    %1985 = vst [vmem:[#allocation2 + $0x2b8] sm:$0xff] %v1729
    %1986 = vst [vmem:[#allocation2 + $0x2c0] sm:$0xff] %v1730
    %1987 = vst [vmem:[#allocation2 + $0x2c8] sm:$0xff] %v1731
    %1988 = vst [vmem:[#allocation2 + $0x2d0] sm:$0xff] %v1732
    %1989 = vst [vmem:[#allocation2 + $0x2d8] sm:$0xff] %v1733
    %1990 = vst [vmem:[#allocation2 + $0x2e0] sm:$0xff] %v1734
    %1991 = vst [vmem:[#allocation2 + $0x2e8] sm:$0xff] %v1735
    %1992 = vst [vmem:[#allocation2 + $0x2f0] sm:$0xff] %v1736
    %1993 = vst [vmem:[#allocation2 + $0x2f8] sm:$0xff] %v1737
    %1994 = vst [vmem:[#allocation2 + $0x300] sm:$0xff] %v1738
    %1995 = vst [vmem:[#allocation2 + $0x308] sm:$0xff] %v1739
    %1996 = vst [vmem:[#allocation2 + $0x310] sm:$0xff] %v1740
    %1997 = vst [vmem:[#allocation2 + $0x318] sm:$0xff] %v1741
    %1998 = vst [vmem:[#allocation2 + $0x320] sm:$0xff] %v1742
    %1999 = vst [vmem:[#allocation2 + $0x328] sm:$0xff] %v1743
    %2000 = vst [vmem:[#allocation2 + $0x330] sm:$0xff] %v1744
    %2001 = vst [vmem:[#allocation2 + $0x338] sm:$0xff] %v1745
    %2002 = vst [vmem:[#allocation2 + $0x340] sm:$0xff] %v1746
    %2003 = vst [vmem:[#allocation2 + $0x348] sm:$0xff] %v1747
    %2004 = vst [vmem:[#allocation2 + $0x350] sm:$0xff] %v1748
    %2005 = vst [vmem:[#allocation2 + $0x358] sm:$0xff] %v1749
    %2006 = vst [vmem:[#allocation2 + $0x360] sm:$0xff] %v1750
    %2007 = vst [vmem:[#allocation2 + $0x368] sm:$0xff] %v1751
    %2008 = vst [vmem:[#allocation2 + $0x370] sm:$0xff] %v1752
    %2009 = vst [vmem:[#allocation2 + $0x378] sm:$0xff] %v1753
    %2010 = vst [vmem:[#allocation2 + $0x380] sm:$0xff] %v1754
    %2011 = vst [vmem:[#allocation2 + $0x388] sm:$0xff] %v1755
    %2012 = vst [vmem:[#allocation2 + $0x390] sm:$0xff] %v1756
    %2013 = vst [vmem:[#allocation2 + $0x398] sm:$0xff] %v1757
    %2014 = vst [vmem:[#allocation2 + $0x3a0] sm:$0xff] %v1758
    %2015 = vst [vmem:[#allocation2 + $0x3a8] sm:$0xff] %v1759
    %2016 = vst [vmem:[#allocation2 + $0x3b0] sm:$0xff] %v1760
    %2017 = vst [vmem:[#allocation2 + $0x3b8] sm:$0xff] %v1761
    %2018 = vst [vmem:[#allocation2 + $0x3c0] sm:$0xff] %v1762
    %2019 = vst [vmem:[#allocation2 + $0x3c8] sm:$0xff] %v1763
    %2020 = vst [vmem:[#allocation2 + $0x3d0] sm:$0xff] %v1764
    %2021 = vst [vmem:[#allocation2 + $0x3d8] sm:$0xff] %v1765
    %2022 = vst [vmem:[#allocation2 + $0x3e0] sm:$0xff] %v1766
    %2023 = vst [vmem:[#allocation2 + $0x3e8] sm:$0xff] %v1767
    %2024 = vst [vmem:[#allocation2 + $0x3f0] sm:$0xff] %v1768
    %2025 = vst [vmem:[#allocation2 + $0x3f8] sm:$0xff] %v1769
    %v2026 = vld [vmem:[#allocation4] sm:$0xff]
    %v2027 = vld [vmem:[#allocation4 + $0x8] sm:$0xff]
    %v2028 = vld [vmem:[#allocation4 + $0x10] sm:$0xff]
    %v2029 = vld [vmem:[#allocation4 + $0x18] sm:$0xff]
    %v2030 = vadd.f32 %v459, %v463
    %v2031 = vadd.f32 %v2030, %v469
    %v2032 = vadd.f32 %v2031, %v473
    %v2033 = vadd.f32 %v2032, %v479
    %v2034 = vadd.f32 %v2033, %v483
    %v2035 = vadd.f32 %v2034, %v489
    %v2036 = vadd.f32 %v2035, %v493
    %v2037 = vadd.f32 %v2036, %v499
    %v2038 = vadd.f32 %v2037, %v503
    %v2039 = vadd.f32 %v2038, %v509
    %v2040 = vadd.f32 %v2039, %v513
    %v2041 = vadd.f32 %v2040, %v519
    %v2042 = vadd.f32 %v2041, %v523
    %v2043 = vadd.f32 %v2042, %v529
    %v2044 = vadd.f32 %v2043, %v533
    %v2045 = vadd.f32 %v2044, %v539
    %v2046 = vadd.f32 %v2045, %v543
    %v2047 = vadd.f32 %v2046, %v549
    %v2048 = vadd.f32 %v2047, %v553
    %v2049 = vadd.f32 %v2048, %v559
    %v2050 = vadd.f32 %v2049, %v563
    %v2051 = vadd.f32 %v2050, %v569
    %v2052 = vadd.f32 %v2051, %v573
    %v2053 = vadd.f32 %v2052, %v579
    %v2054 = vadd.f32 %v2053, %v583
    %v2055 = vadd.f32 %v2054, %v589
    %v2056 = vadd.f32 %v2055, %v593
    %v2057 = vadd.f32 %v2056, %v599
    %v2058 = vadd.f32 %v2057, %v603
    %v2059 = vadd.f32 %v2058, %v609
    %v2060 = vadd.f32 %v2059, %v613
    %v2061 = vadd.f32 %v2060, %v619
    %v2062 = vadd.f32 %v2061, %v623
    %v2063 = vadd.f32 %v2062, %v629
    %v2064 = vadd.f32 %v2063, %v633
    %v2065 = vadd.f32 %v2064, %v639
    %v2066 = vadd.f32 %v2065, %v643
    %v2067 = vadd.f32 %v2066, %v649
    %v2068 = vadd.f32 %v2067, %v653
    %v2069 = vadd.f32 %v2068, %v659
    %v2070 = vadd.f32 %v2069, %v663
    %v2071 = vadd.f32 %v2070, %v669
    %v2072 = vadd.f32 %v2071, %v673
    %v2073 = vadd.f32 %v2072, %v679
    %v2074 = vadd.f32 %v2073, %v683
    %v2075 = vadd.f32 %v2074, %v689
    %v2076 = vadd.f32 %v2075, %v693
    %v2077 = vadd.f32 %v2076, %v699
    %v2078 = vadd.f32 %v2077, %v703
    %v2079 = vadd.f32 %v2078, %v709
    %v2080 = vadd.f32 %v2079, %v713
    %v2081 = vadd.f32 %v2080, %v719
    %v2082 = vadd.f32 %v2081, %v723
    %v2083 = vadd.f32 %v2082, %v729
    %v2084 = vadd.f32 %v2083, %v733
    %v2085 = vadd.f32 %v2084, %v739
    %v2086 = vadd.f32 %v2085, %v743
    %v2087 = vadd.f32 %v2086, %v749
    %v2088 = vadd.f32 %v2087, %v753
    %v2089 = vadd.f32 %v2088, %v759
    %v2090 = vadd.f32 %v2089, %v763
    %v2091 = vadd.f32 %v2090, %v769
    %v2092 = vadd.f32 %v2091, %v773
    %v2093 = vadd.f32 %v461, %v465
    %v2094 = vadd.f32 %v2093, %v471
    %v2095 = vadd.f32 %v2094, %v475
    %v2096 = vadd.f32 %v2095, %v481
    %v2097 = vadd.f32 %v2096, %v485
    %v2098 = vadd.f32 %v2097, %v491
    %v2099 = vadd.f32 %v2098, %v495
    %v2100 = vadd.f32 %v2099, %v501
    %v2101 = vadd.f32 %v2100, %v505
    %v2102 = vadd.f32 %v2101, %v511
    %v2103 = vadd.f32 %v2102, %v515
    %v2104 = vadd.f32 %v2103, %v521
    %v2105 = vadd.f32 %v2104, %v525
    %v2106 = vadd.f32 %v2105, %v531
    %v2107 = vadd.f32 %v2106, %v535
    %v2108 = vadd.f32 %v2107, %v541
    %v2109 = vadd.f32 %v2108, %v545
    %v2110 = vadd.f32 %v2109, %v551
    %v2111 = vadd.f32 %v2110, %v555
    %v2112 = vadd.f32 %v2111, %v561
    %v2113 = vadd.f32 %v2112, %v565
    %v2114 = vadd.f32 %v2113, %v571
    %v2115 = vadd.f32 %v2114, %v575
    %v2116 = vadd.f32 %v2115, %v581
    %v2117 = vadd.f32 %v2116, %v585
    %v2118 = vadd.f32 %v2117, %v591
    %v2119 = vadd.f32 %v2118, %v595
    %v2120 = vadd.f32 %v2119, %v601
    %v2121 = vadd.f32 %v2120, %v605
    %v2122 = vadd.f32 %v2121, %v611
    %v2123 = vadd.f32 %v2122, %v615
    %v2124 = vadd.f32 %v2123, %v621
    %v2125 = vadd.f32 %v2124, %v625
    %v2126 = vadd.f32 %v2125, %v631
    %v2127 = vadd.f32 %v2126, %v635
    %v2128 = vadd.f32 %v2127, %v641
    %v2129 = vadd.f32 %v2128, %v645
    %v2130 = vadd.f32 %v2129, %v651
    %v2131 = vadd.f32 %v2130, %v655
    %v2132 = vadd.f32 %v2131, %v661
    %v2133 = vadd.f32 %v2132, %v665
    %v2134 = vadd.f32 %v2133, %v671
    %v2135 = vadd.f32 %v2134, %v675
    %v2136 = vadd.f32 %v2135, %v681
    %v2137 = vadd.f32 %v2136, %v685
    %v2138 = vadd.f32 %v2137, %v691
    %v2139 = vadd.f32 %v2138, %v695
    %v2140 = vadd.f32 %v2139, %v701
    %v2141 = vadd.f32 %v2140, %v705
    %v2142 = vadd.f32 %v2141, %v711
    %v2143 = vadd.f32 %v2142, %v715
    %v2144 = vadd.f32 %v2143, %v721
    %v2145 = vadd.f32 %v2144, %v725
    %v2146 = vadd.f32 %v2145, %v731
    %v2147 = vadd.f32 %v2146, %v735
    %v2148 = vadd.f32 %v2147, %v741
    %v2149 = vadd.f32 %v2148, %v745
    %v2150 = vadd.f32 %v2149, %v751
    %v2151 = vadd.f32 %v2150, %v755
    %v2152 = vadd.f32 %v2151, %v761
    %v2153 = vadd.f32 %v2152, %v765
    %v2154 = vadd.f32 %v2153, %v771
    %v2155 = vadd.f32 %v2154, %v775
    %v2156 = vadd.f32 %v812, %v816
    %v2157 = vadd.f32 %v2156, %v822
    %v2158 = vadd.f32 %v2157, %v826
    %v2159 = vadd.f32 %v2158, %v832
    %v2160 = vadd.f32 %v2159, %v836
    %v2161 = vadd.f32 %v2160, %v842
    %v2162 = vadd.f32 %v2161, %v846
    %v2163 = vadd.f32 %v2162, %v852
    %v2164 = vadd.f32 %v2163, %v856
    %v2165 = vadd.f32 %v2164, %v862
    %v2166 = vadd.f32 %v2165, %v866
    %v2167 = vadd.f32 %v2166, %v872
    %v2168 = vadd.f32 %v2167, %v876
    %v2169 = vadd.f32 %v2168, %v882
    %v2170 = vadd.f32 %v2169, %v886
    %v2171 = vadd.f32 %v2170, %v892
    %v2172 = vadd.f32 %v2171, %v896
    %v2173 = vadd.f32 %v2172, %v902
    %v2174 = vadd.f32 %v2173, %v906
    %v2175 = vadd.f32 %v2174, %v912
    %v2176 = vadd.f32 %v2175, %v916
    %v2177 = vadd.f32 %v2176, %v922
    %v2178 = vadd.f32 %v2177, %v926
    %v2179 = vadd.f32 %v2178, %v932
    %v2180 = vadd.f32 %v2179, %v936
    %v2181 = vadd.f32 %v2180, %v942
    %v2182 = vadd.f32 %v2181, %v946
    %v2183 = vadd.f32 %v2182, %v952
    %v2184 = vadd.f32 %v2183, %v956
    %v2185 = vadd.f32 %v2184, %v962
    %v2186 = vadd.f32 %v2185, %v966
    %v2187 = vadd.f32 %v2186, %v972
    %v2188 = vadd.f32 %v2187, %v976
    %v2189 = vadd.f32 %v2188, %v982
    %v2190 = vadd.f32 %v2189, %v986
    %v2191 = vadd.f32 %v2190, %v992
    %v2192 = vadd.f32 %v2191, %v996
    %v2193 = vadd.f32 %v2192, %v1002
    %v2194 = vadd.f32 %v2193, %v1006
    %v2195 = vadd.f32 %v2194, %v1012
    %v2196 = vadd.f32 %v2195, %v1016
    %v2197 = vadd.f32 %v2196, %v1022
    %v2198 = vadd.f32 %v2197, %v1026
    %v2199 = vadd.f32 %v2198, %v1032
    %v2200 = vadd.f32 %v2199, %v1036
    %v2201 = vadd.f32 %v2200, %v1042
    %v2202 = vadd.f32 %v2201, %v1046
    %v2203 = vadd.f32 %v2202, %v1052
    %v2204 = vadd.f32 %v2203, %v1056
    %v2205 = vadd.f32 %v2204, %v1062
    %v2206 = vadd.f32 %v2205, %v1066
    %v2207 = vadd.f32 %v2206, %v1072
    %v2208 = vadd.f32 %v2207, %v1076
    %v2209 = vadd.f32 %v2208, %v1082
    %v2210 = vadd.f32 %v2209, %v1086
    %v2211 = vadd.f32 %v2210, %v1092
    %v2212 = vadd.f32 %v2211, %v1096
    %v2213 = vadd.f32 %v2212, %v1102
    %v2214 = vadd.f32 %v2213, %v1106
    %v2215 = vadd.f32 %v2214, %v1112
    %v2216 = vadd.f32 %v2215, %v1116
    %v2217 = vadd.f32 %v2216, %v1122
    %v2218 = vadd.f32 %v2217, %v1126
    %v2219 = vadd.f32 %v814, %v818
    %v2220 = vadd.f32 %v2219, %v824
    %v2221 = vadd.f32 %v2220, %v828
    %v2222 = vadd.f32 %v2221, %v834
    %v2223 = vadd.f32 %v2222, %v838
    %v2224 = vadd.f32 %v2223, %v844
    %v2225 = vadd.f32 %v2224, %v848
    %v2226 = vadd.f32 %v2225, %v854
    %v2227 = vadd.f32 %v2226, %v858
    %v2228 = vadd.f32 %v2227, %v864
    %v2229 = vadd.f32 %v2228, %v868
    %v2230 = vadd.f32 %v2229, %v874
    %v2231 = vadd.f32 %v2230, %v878
    %v2232 = vadd.f32 %v2231, %v884
    %v2233 = vadd.f32 %v2232, %v888
    %v2234 = vadd.f32 %v2233, %v894
    %v2235 = vadd.f32 %v2234, %v898
    %v2236 = vadd.f32 %v2235, %v904
    %v2237 = vadd.f32 %v2236, %v908
    %v2238 = vadd.f32 %v2237, %v914
    %v2239 = vadd.f32 %v2238, %v918
    %v2240 = vadd.f32 %v2239, %v924
    %v2241 = vadd.f32 %v2240, %v928
    %v2242 = vadd.f32 %v2241, %v934
    %v2243 = vadd.f32 %v2242, %v938
    %v2244 = vadd.f32 %v2243, %v944
    %v2245 = vadd.f32 %v2244, %v948
    %v2246 = vadd.f32 %v2245, %v954
    %v2247 = vadd.f32 %v2246, %v958
    %v2248 = vadd.f32 %v2247, %v964
    %v2249 = vadd.f32 %v2248, %v968
    %v2250 = vadd.f32 %v2249, %v974
    %v2251 = vadd.f32 %v2250, %v978
    %v2252 = vadd.f32 %v2251, %v984
    %v2253 = vadd.f32 %v2252, %v988
    %v2254 = vadd.f32 %v2253, %v994
    %v2255 = vadd.f32 %v2254, %v998
    %v2256 = vadd.f32 %v2255, %v1004
    %v2257 = vadd.f32 %v2256, %v1008
    %v2258 = vadd.f32 %v2257, %v1014
    %v2259 = vadd.f32 %v2258, %v1018
    %v2260 = vadd.f32 %v2259, %v1024
    %v2261 = vadd.f32 %v2260, %v1028
    %v2262 = vadd.f32 %v2261, %v1034
    %v2263 = vadd.f32 %v2262, %v1038
    %v2264 = vadd.f32 %v2263, %v1044
    %v2265 = vadd.f32 %v2264, %v1048
    %v2266 = vadd.f32 %v2265, %v1054
    %v2267 = vadd.f32 %v2266, %v1058
    %v2268 = vadd.f32 %v2267, %v1064
    %v2269 = vadd.f32 %v2268, %v1068
    %v2270 = vadd.f32 %v2269, %v1074
    %v2271 = vadd.f32 %v2270, %v1078
    %v2272 = vadd.f32 %v2271, %v1084
    %v2273 = vadd.f32 %v2272, %v1088
    %v2274 = vadd.f32 %v2273, %v1094
    %v2275 = vadd.f32 %v2274, %v1098
    %v2276 = vadd.f32 %v2275, %v1104
    %v2277 = vadd.f32 %v2276, %v1108
    %v2278 = vadd.f32 %v2277, %v1114
    %v2279 = vadd.f32 %v2278, %v1118
    %v2280 = vadd.f32 %v2279, %v1124
    %v2281 = vadd.f32 %v2280, %v1128
    %v2282 = vadd.f32 %v2026, %v2092
    %v2283 = vadd.f32 %v2027, %v2155
    %v2284 = vadd.f32 %v2028, %v2218
    %v2285 = vadd.f32 %v2029, %v2281
    %2286 = vst [vmem:[#allocation4] sm:$0xff] %v2282
    %2287 = vst [vmem:[#allocation4 + $0x8] sm:$0xff] %v2283
    %2288 = vst [vmem:[#allocation4 + $0x10] sm:$0xff] %v2284
    %2289 = vst [vmem:[#allocation4 + $0x18] sm:$0xff] %v2285
    %v2290 = vld [vmem:[#allocation6] sm:$0xff]
    %v2291 = vld [vmem:[#allocation6 + $0x8] sm:$0xff]
    %v2292 = vld [vmem:[#allocation6 + $0x10] sm:$0xff]
    %v2293 = vld [vmem:[#allocation6 + $0x18] sm:$0xff]
    %v2294 = vmul.f32 %v459, %v459
    %v2295 = vmul.f32 %v461, %v461
    %v2296 = vmul.f32 %v812, %v812
    %v2297 = vmul.f32 %v814, %v814
    %v2298 = vmul.f32 %v463, %v463
    %v2299 = vmul.f32 %v465, %v465
    %v2300 = vmul.f32 %v816, %v816
    %v2301 = vmul.f32 %v818, %v818
    %v2302 = vmul.f32 %v469, %v469
    %v2303 = vmul.f32 %v471, %v471
    %v2304 = vmul.f32 %v822, %v822
    %v2305 = vmul.f32 %v824, %v824
    %v2306 = vmul.f32 %v473, %v473
    %v2307 = vmul.f32 %v475, %v475
    %v2308 = vmul.f32 %v826, %v826
    %v2309 = vmul.f32 %v828, %v828
    %v2310 = vmul.f32 %v479, %v479
    %v2311 = vmul.f32 %v481, %v481
    %v2312 = vmul.f32 %v832, %v832
    %v2313 = vmul.f32 %v834, %v834
    %v2314 = vmul.f32 %v483, %v483
    %v2315 = vmul.f32 %v485, %v485
    %v2316 = vmul.f32 %v836, %v836
    %v2317 = vmul.f32 %v838, %v838
    %v2318 = vmul.f32 %v489, %v489
    %v2319 = vmul.f32 %v491, %v491
    %v2320 = vmul.f32 %v842, %v842
    %v2321 = vmul.f32 %v844, %v844
    %v2322 = vmul.f32 %v493, %v493
    %v2323 = vmul.f32 %v495, %v495
    %v2324 = vmul.f32 %v846, %v846
    %v2325 = vmul.f32 %v848, %v848
    %v2326 = vmul.f32 %v499, %v499
    %v2327 = vmul.f32 %v501, %v501
    %v2328 = vmul.f32 %v852, %v852
    %v2329 = vmul.f32 %v854, %v854
    %v2330 = vmul.f32 %v503, %v503
    %v2331 = vmul.f32 %v505, %v505
    %v2332 = vmul.f32 %v856, %v856
    %v2333 = vmul.f32 %v858, %v858
    %v2334 = vmul.f32 %v509, %v509
    %v2335 = vmul.f32 %v511, %v511
    %v2336 = vmul.f32 %v862, %v862
    %v2337 = vmul.f32 %v864, %v864
    %v2338 = vmul.f32 %v513, %v513
    %v2339 = vmul.f32 %v515, %v515
    %v2340 = vmul.f32 %v866, %v866
    %v2341 = vmul.f32 %v868, %v868
    %v2342 = vmul.f32 %v519, %v519
    %v2343 = vmul.f32 %v521, %v521
    %v2344 = vmul.f32 %v872, %v872
    %v2345 = vmul.f32 %v874, %v874
    %v2346 = vmul.f32 %v523, %v523
    %v2347 = vmul.f32 %v525, %v525
    %v2348 = vmul.f32 %v876, %v876
    %v2349 = vmul.f32 %v878, %v878
    %v2350 = vmul.f32 %v529, %v529
    %v2351 = vmul.f32 %v531, %v531
    %v2352 = vmul.f32 %v882, %v882
    %v2353 = vmul.f32 %v884, %v884
    %v2354 = vmul.f32 %v533, %v533
    %v2355 = vmul.f32 %v535, %v535
    %v2356 = vmul.f32 %v886, %v886
    %v2357 = vmul.f32 %v888, %v888
    %v2358 = vmul.f32 %v539, %v539
    %v2359 = vmul.f32 %v541, %v541
    %v2360 = vmul.f32 %v892, %v892
    %v2361 = vmul.f32 %v894, %v894
    %v2362 = vmul.f32 %v543, %v543
    %v2363 = vmul.f32 %v545, %v545
    %v2364 = vmul.f32 %v896, %v896
    %v2365 = vmul.f32 %v898, %v898
    %v2366 = vmul.f32 %v549, %v549
    %v2367 = vmul.f32 %v551, %v551
    %v2368 = vmul.f32 %v902, %v902
    %v2369 = vmul.f32 %v904, %v904
    %v2370 = vmul.f32 %v553, %v553
    %v2371 = vmul.f32 %v555, %v555
    %v2372 = vmul.f32 %v906, %v906
    %v2373 = vmul.f32 %v908, %v908
    %v2374 = vmul.f32 %v559, %v559
    %v2375 = vmul.f32 %v561, %v561
    %v2376 = vmul.f32 %v912, %v912
    %v2377 = vmul.f32 %v914, %v914
    %v2378 = vmul.f32 %v563, %v563
    %v2379 = vmul.f32 %v565, %v565
    %v2380 = vmul.f32 %v916, %v916
    %v2381 = vmul.f32 %v918, %v918
    %v2382 = vmul.f32 %v569, %v569
    %v2383 = vmul.f32 %v571, %v571
    %v2384 = vmul.f32 %v922, %v922
    %v2385 = vmul.f32 %v924, %v924
    %v2386 = vmul.f32 %v573, %v573
    %v2387 = vmul.f32 %v575, %v575
    %v2388 = vmul.f32 %v926, %v926
    %v2389 = vmul.f32 %v928, %v928
    %v2390 = vmul.f32 %v579, %v579
    %v2391 = vmul.f32 %v581, %v581
    %v2392 = vmul.f32 %v932, %v932
    %v2393 = vmul.f32 %v934, %v934
    %v2394 = vmul.f32 %v583, %v583
    %v2395 = vmul.f32 %v585, %v585
    %v2396 = vmul.f32 %v936, %v936
    %v2397 = vmul.f32 %v938, %v938
    %v2398 = vmul.f32 %v589, %v589
    %v2399 = vmul.f32 %v591, %v591
    %v2400 = vmul.f32 %v942, %v942
    %v2401 = vmul.f32 %v944, %v944
    %v2402 = vmul.f32 %v593, %v593
    %v2403 = vmul.f32 %v595, %v595
    %v2404 = vmul.f32 %v946, %v946
    %v2405 = vmul.f32 %v948, %v948
    %v2406 = vmul.f32 %v599, %v599
    %v2407 = vmul.f32 %v601, %v601
    %v2408 = vmul.f32 %v952, %v952
    %v2409 = vmul.f32 %v954, %v954
    %v2410 = vmul.f32 %v603, %v603
    %v2411 = vmul.f32 %v605, %v605
    %v2412 = vmul.f32 %v956, %v956
    %v2413 = vmul.f32 %v958, %v958
    %v2414 = vmul.f32 %v609, %v609
    %v2415 = vmul.f32 %v611, %v611
    %v2416 = vmul.f32 %v962, %v962
    %v2417 = vmul.f32 %v964, %v964
    %v2418 = vmul.f32 %v613, %v613
    %v2419 = vmul.f32 %v615, %v615
    %v2420 = vmul.f32 %v966, %v966
    %v2421 = vmul.f32 %v968, %v968
    %v2422 = vmul.f32 %v619, %v619
    %v2423 = vmul.f32 %v621, %v621
    %v2424 = vmul.f32 %v972, %v972
    %v2425 = vmul.f32 %v974, %v974
    %v2426 = vmul.f32 %v623, %v623
    %v2427 = vmul.f32 %v625, %v625
    %v2428 = vmul.f32 %v976, %v976
    %v2429 = vmul.f32 %v978, %v978
    %v2430 = vmul.f32 %v629, %v629
    %v2431 = vmul.f32 %v631, %v631
    %v2432 = vmul.f32 %v982, %v982
    %v2433 = vmul.f32 %v984, %v984
    %v2434 = vmul.f32 %v633, %v633
    %v2435 = vmul.f32 %v635, %v635
    %v2436 = vmul.f32 %v986, %v986
    %v2437 = vmul.f32 %v988, %v988
    %v2438 = vmul.f32 %v639, %v639
    %v2439 = vmul.f32 %v641, %v641
    %v2440 = vmul.f32 %v992, %v992
    %v2441 = vmul.f32 %v994, %v994
    %v2442 = vmul.f32 %v643, %v643
    %v2443 = vmul.f32 %v645, %v645
    %v2444 = vmul.f32 %v996, %v996
    %v2445 = vmul.f32 %v998, %v998
    %v2446 = vmul.f32 %v649, %v649
    %v2447 = vmul.f32 %v651, %v651
    %v2448 = vmul.f32 %v1002, %v1002
    %v2449 = vmul.f32 %v1004, %v1004
    %v2450 = vmul.f32 %v653, %v653
    %v2451 = vmul.f32 %v655, %v655
    %v2452 = vmul.f32 %v1006, %v1006
    %v2453 = vmul.f32 %v1008, %v1008
    %v2454 = vmul.f32 %v659, %v659
    %v2455 = vmul.f32 %v661, %v661
    %v2456 = vmul.f32 %v1012, %v1012
    %v2457 = vmul.f32 %v1014, %v1014
    %v2458 = vmul.f32 %v663, %v663
    %v2459 = vmul.f32 %v665, %v665
    %v2460 = vmul.f32 %v1016, %v1016
    %v2461 = vmul.f32 %v1018, %v1018
    %v2462 = vmul.f32 %v669, %v669
    %v2463 = vmul.f32 %v671, %v671
    %v2464 = vmul.f32 %v1022, %v1022
    %v2465 = vmul.f32 %v1024, %v1024
    %v2466 = vmul.f32 %v673, %v673
    %v2467 = vmul.f32 %v675, %v675
    %v2468 = vmul.f32 %v1026, %v1026
    %v2469 = vmul.f32 %v1028, %v1028
    %v2470 = vmul.f32 %v679, %v679
    %v2471 = vmul.f32 %v681, %v681
    %v2472 = vmul.f32 %v1032, %v1032
    %v2473 = vmul.f32 %v1034, %v1034
    %v2474 = vmul.f32 %v683, %v683
    %v2475 = vmul.f32 %v685, %v685
    %v2476 = vmul.f32 %v1036, %v1036
    %v2477 = vmul.f32 %v1038, %v1038
    %v2478 = vmul.f32 %v689, %v689
    %v2479 = vmul.f32 %v691, %v691
    %v2480 = vmul.f32 %v1042, %v1042
    %v2481 = vmul.f32 %v1044, %v1044
    %v2482 = vmul.f32 %v693, %v693
    %v2483 = vmul.f32 %v695, %v695
    %v2484 = vmul.f32 %v1046, %v1046
    %v2485 = vmul.f32 %v1048, %v1048
    %v2486 = vmul.f32 %v699, %v699
    %v2487 = vmul.f32 %v701, %v701
    %v2488 = vmul.f32 %v1052, %v1052
    %v2489 = vmul.f32 %v1054, %v1054
    %v2490 = vmul.f32 %v703, %v703
    %v2491 = vmul.f32 %v705, %v705
    %v2492 = vmul.f32 %v1056, %v1056
    %v2493 = vmul.f32 %v1058, %v1058
    %v2494 = vmul.f32 %v709, %v709
    %v2495 = vmul.f32 %v711, %v711
    %v2496 = vmul.f32 %v1062, %v1062
    %v2497 = vmul.f32 %v1064, %v1064
    %v2498 = vmul.f32 %v713, %v713
    %v2499 = vmul.f32 %v715, %v715
    %v2500 = vmul.f32 %v1066, %v1066
    %v2501 = vmul.f32 %v1068, %v1068
    %v2502 = vmul.f32 %v719, %v719
    %v2503 = vmul.f32 %v721, %v721
    %v2504 = vmul.f32 %v1072, %v1072
    %v2505 = vmul.f32 %v1074, %v1074
    %v2506 = vmul.f32 %v723, %v723
    %v2507 = vmul.f32 %v725, %v725
    %v2508 = vmul.f32 %v1076, %v1076
    %v2509 = vmul.f32 %v1078, %v1078
    %v2510 = vmul.f32 %v729, %v729
    %v2511 = vmul.f32 %v731, %v731
    %v2512 = vmul.f32 %v1082, %v1082
    %v2513 = vmul.f32 %v1084, %v1084
    %v2514 = vmul.f32 %v733, %v733
    %v2515 = vmul.f32 %v735, %v735
    %v2516 = vmul.f32 %v1086, %v1086
    %v2517 = vmul.f32 %v1088, %v1088
    %v2518 = vmul.f32 %v739, %v739
    %v2519 = vmul.f32 %v741, %v741
    %v2520 = vmul.f32 %v1092, %v1092
    %v2521 = vmul.f32 %v1094, %v1094
    %v2522 = vmul.f32 %v743, %v743
    %v2523 = vmul.f32 %v745, %v745
    %v2524 = vmul.f32 %v1096, %v1096
    %v2525 = vmul.f32 %v1098, %v1098
    %v2526 = vmul.f32 %v749, %v749
    %v2527 = vmul.f32 %v751, %v751
    %v2528 = vmul.f32 %v1102, %v1102
    %v2529 = vmul.f32 %v1104, %v1104
    %v2530 = vmul.f32 %v753, %v753
    %v2531 = vmul.f32 %v755, %v755
    %v2532 = vmul.f32 %v1106, %v1106
    %v2533 = vmul.f32 %v1108, %v1108
    %v2534 = vmul.f32 %v759, %v759
    %v2535 = vmul.f32 %v761, %v761
    %v2536 = vmul.f32 %v1112, %v1112
    %v2537 = vmul.f32 %v1114, %v1114
    %v2538 = vmul.f32 %v763, %v763
    %v2539 = vmul.f32 %v765, %v765
    %v2540 = vmul.f32 %v1116, %v1116
    %v2541 = vmul.f32 %v1118, %v1118
    %v2542 = vmul.f32 %v769, %v769
    %v2543 = vmul.f32 %v771, %v771
    %v2544 = vmul.f32 %v1122, %v1122
    %v2545 = vmul.f32 %v1124, %v1124
    %v2546 = vmul.f32 %v773, %v773
    %v2547 = vmul.f32 %v775, %v775
    %v2548 = vmul.f32 %v1126, %v1126
    %v2549 = vmul.f32 %v1128, %v1128
    %v2550 = vadd.f32 %v2294, %v2298
    %v2551 = vadd.f32 %v2550, %v2302
    %v2552 = vadd.f32 %v2551, %v2306
    %v2553 = vadd.f32 %v2552, %v2310
    %v2554 = vadd.f32 %v2553, %v2314
    %v2555 = vadd.f32 %v2554, %v2318
    %v2556 = vadd.f32 %v2555, %v2322
    %v2557 = vadd.f32 %v2556, %v2326
    %v2558 = vadd.f32 %v2557, %v2330
    %v2559 = vadd.f32 %v2558, %v2334
    %v2560 = vadd.f32 %v2559, %v2338
    %v2561 = vadd.f32 %v2560, %v2342
    %v2562 = vadd.f32 %v2561, %v2346
    %v2563 = vadd.f32 %v2562, %v2350
    %v2564 = vadd.f32 %v2563, %v2354
    %v2565 = vadd.f32 %v2564, %v2358
    %v2566 = vadd.f32 %v2565, %v2362
    %v2567 = vadd.f32 %v2566, %v2366
    %v2568 = vadd.f32 %v2567, %v2370
    %v2569 = vadd.f32 %v2568, %v2374
    %v2570 = vadd.f32 %v2569, %v2378
    %v2571 = vadd.f32 %v2570, %v2382
    %v2572 = vadd.f32 %v2571, %v2386
    %v2573 = vadd.f32 %v2572, %v2390
    %v2574 = vadd.f32 %v2573, %v2394
    %v2575 = vadd.f32 %v2574, %v2398
    %v2576 = vadd.f32 %v2575, %v2402
    %v2577 = vadd.f32 %v2576, %v2406
    %v2578 = vadd.f32 %v2577, %v2410
    %v2579 = vadd.f32 %v2578, %v2414
    %v2580 = vadd.f32 %v2579, %v2418
    %v2581 = vadd.f32 %v2580, %v2422
    %v2582 = vadd.f32 %v2581, %v2426
    %v2583 = vadd.f32 %v2582, %v2430
    %v2584 = vadd.f32 %v2583, %v2434
    %v2585 = vadd.f32 %v2584, %v2438
    %v2586 = vadd.f32 %v2585, %v2442
    %v2587 = vadd.f32 %v2586, %v2446
    %v2588 = vadd.f32 %v2587, %v2450
    %v2589 = vadd.f32 %v2588, %v2454
    %v2590 = vadd.f32 %v2589, %v2458
    %v2591 = vadd.f32 %v2590, %v2462
    %v2592 = vadd.f32 %v2591, %v2466
    %v2593 = vadd.f32 %v2592, %v2470
    %v2594 = vadd.f32 %v2593, %v2474
    %v2595 = vadd.f32 %v2594, %v2478
    %v2596 = vadd.f32 %v2595, %v2482
    %v2597 = vadd.f32 %v2596, %v2486
    %v2598 = vadd.f32 %v2597, %v2490
    %v2599 = vadd.f32 %v2598, %v2494
    %v2600 = vadd.f32 %v2599, %v2498
    %v2601 = vadd.f32 %v2600, %v2502
    %v2602 = vadd.f32 %v2601, %v2506
    %v2603 = vadd.f32 %v2602, %v2510
    %v2604 = vadd.f32 %v2603, %v2514
    %v2605 = vadd.f32 %v2604, %v2518
    %v2606 = vadd.f32 %v2605, %v2522
    %v2607 = vadd.f32 %v2606, %v2526
    %v2608 = vadd.f32 %v2607, %v2530
    %v2609 = vadd.f32 %v2608, %v2534
    %v2610 = vadd.f32 %v2609, %v2538
    %v2611 = vadd.f32 %v2610, %v2542
    %v2612 = vadd.f32 %v2611, %v2546
    %v2613 = vadd.f32 %v2295, %v2299
    %v2614 = vadd.f32 %v2613, %v2303
    %v2615 = vadd.f32 %v2614, %v2307
    %v2616 = vadd.f32 %v2615, %v2311
    %v2617 = vadd.f32 %v2616, %v2315
    %v2618 = vadd.f32 %v2617, %v2319
    %v2619 = vadd.f32 %v2618, %v2323
    %v2620 = vadd.f32 %v2619, %v2327
    %v2621 = vadd.f32 %v2620, %v2331
    %v2622 = vadd.f32 %v2621, %v2335
    %v2623 = vadd.f32 %v2622, %v2339
    %v2624 = vadd.f32 %v2623, %v2343
    %v2625 = vadd.f32 %v2624, %v2347
    %v2626 = vadd.f32 %v2625, %v2351
    %v2627 = vadd.f32 %v2626, %v2355
    %v2628 = vadd.f32 %v2627, %v2359
    %v2629 = vadd.f32 %v2628, %v2363
    %v2630 = vadd.f32 %v2629, %v2367
    %v2631 = vadd.f32 %v2630, %v2371
    %v2632 = vadd.f32 %v2631, %v2375
    %v2633 = vadd.f32 %v2632, %v2379
    %v2634 = vadd.f32 %v2633, %v2383
    %v2635 = vadd.f32 %v2634, %v2387
    %v2636 = vadd.f32 %v2635, %v2391
    %v2637 = vadd.f32 %v2636, %v2395
    %v2638 = vadd.f32 %v2637, %v2399
    %v2639 = vadd.f32 %v2638, %v2403
    %v2640 = vadd.f32 %v2639, %v2407
    %v2641 = vadd.f32 %v2640, %v2411
    %v2642 = vadd.f32 %v2641, %v2415
    %v2643 = vadd.f32 %v2642, %v2419
    %v2644 = vadd.f32 %v2643, %v2423
    %v2645 = vadd.f32 %v2644, %v2427
    %v2646 = vadd.f32 %v2645, %v2431
    %v2647 = vadd.f32 %v2646, %v2435
    %v2648 = vadd.f32 %v2647, %v2439
    %v2649 = vadd.f32 %v2648, %v2443
    %v2650 = vadd.f32 %v2649, %v2447
    %v2651 = vadd.f32 %v2650, %v2451
    %v2652 = vadd.f32 %v2651, %v2455
    %v2653 = vadd.f32 %v2652, %v2459
    %v2654 = vadd.f32 %v2653, %v2463
    %v2655 = vadd.f32 %v2654, %v2467
    %v2656 = vadd.f32 %v2655, %v2471
    %v2657 = vadd.f32 %v2656, %v2475
    %v2658 = vadd.f32 %v2657, %v2479
    %v2659 = vadd.f32 %v2658, %v2483
    %v2660 = vadd.f32 %v2659, %v2487
    %v2661 = vadd.f32 %v2660, %v2491
    %v2662 = vadd.f32 %v2661, %v2495
    %v2663 = vadd.f32 %v2662, %v2499
    %v2664 = vadd.f32 %v2663, %v2503
    %v2665 = vadd.f32 %v2664, %v2507
    %v2666 = vadd.f32 %v2665, %v2511
    %v2667 = vadd.f32 %v2666, %v2515
    %v2668 = vadd.f32 %v2667, %v2519
    %v2669 = vadd.f32 %v2668, %v2523
    %v2670 = vadd.f32 %v2669, %v2527
    %v2671 = vadd.f32 %v2670, %v2531
    %v2672 = vadd.f32 %v2671, %v2535
    %v2673 = vadd.f32 %v2672, %v2539
    %v2674 = vadd.f32 %v2673, %v2543
    %v2675 = vadd.f32 %v2674, %v2547
    %v2676 = vadd.f32 %v2296, %v2300
    %v2677 = vadd.f32 %v2676, %v2304
    %v2678 = vadd.f32 %v2677, %v2308
    %v2679 = vadd.f32 %v2678, %v2312
    %v2680 = vadd.f32 %v2679, %v2316
    %v2681 = vadd.f32 %v2680, %v2320
    %v2682 = vadd.f32 %v2681, %v2324
    %v2683 = vadd.f32 %v2682, %v2328
    %v2684 = vadd.f32 %v2683, %v2332
    %v2685 = vadd.f32 %v2684, %v2336
    %v2686 = vadd.f32 %v2685, %v2340
    %v2687 = vadd.f32 %v2686, %v2344
    %v2688 = vadd.f32 %v2687, %v2348
    %v2689 = vadd.f32 %v2688, %v2352
    %v2690 = vadd.f32 %v2689, %v2356
    %v2691 = vadd.f32 %v2690, %v2360
    %v2692 = vadd.f32 %v2691, %v2364
    %v2693 = vadd.f32 %v2692, %v2368
    %v2694 = vadd.f32 %v2693, %v2372
    %v2695 = vadd.f32 %v2694, %v2376
    %v2696 = vadd.f32 %v2695, %v2380
    %v2697 = vadd.f32 %v2696, %v2384
    %v2698 = vadd.f32 %v2697, %v2388
    %v2699 = vadd.f32 %v2698, %v2392
    %v2700 = vadd.f32 %v2699, %v2396
    %v2701 = vadd.f32 %v2700, %v2400
    %v2702 = vadd.f32 %v2701, %v2404
    %v2703 = vadd.f32 %v2702, %v2408
    %v2704 = vadd.f32 %v2703, %v2412
    %v2705 = vadd.f32 %v2704, %v2416
    %v2706 = vadd.f32 %v2705, %v2420
    %v2707 = vadd.f32 %v2706, %v2424
    %v2708 = vadd.f32 %v2707, %v2428
    %v2709 = vadd.f32 %v2708, %v2432
    %v2710 = vadd.f32 %v2709, %v2436
    %v2711 = vadd.f32 %v2710, %v2440
    %v2712 = vadd.f32 %v2711, %v2444
    %v2713 = vadd.f32 %v2712, %v2448
    %v2714 = vadd.f32 %v2713, %v2452
    %v2715 = vadd.f32 %v2714, %v2456
    %v2716 = vadd.f32 %v2715, %v2460
    %v2717 = vadd.f32 %v2716, %v2464
    %v2718 = vadd.f32 %v2717, %v2468
    %v2719 = vadd.f32 %v2718, %v2472
    %v2720 = vadd.f32 %v2719, %v2476
    %v2721 = vadd.f32 %v2720, %v2480
    %v2722 = vadd.f32 %v2721, %v2484
    %v2723 = vadd.f32 %v2722, %v2488
    %v2724 = vadd.f32 %v2723, %v2492
    %v2725 = vadd.f32 %v2724, %v2496
    %v2726 = vadd.f32 %v2725, %v2500
    %v2727 = vadd.f32 %v2726, %v2504
    %v2728 = vadd.f32 %v2727, %v2508
    %v2729 = vadd.f32 %v2728, %v2512
    %v2730 = vadd.f32 %v2729, %v2516
    %v2731 = vadd.f32 %v2730, %v2520
    %v2732 = vadd.f32 %v2731, %v2524
    %v2733 = vadd.f32 %v2732, %v2528
    %v2734 = vadd.f32 %v2733, %v2532
    %v2735 = vadd.f32 %v2734, %v2536
    %v2736 = vadd.f32 %v2735, %v2540
    %v2737 = vadd.f32 %v2736, %v2544
    %v2738 = vadd.f32 %v2737, %v2548
    %v2739 = vadd.f32 %v2297, %v2301
    %v2740 = vadd.f32 %v2739, %v2305
    %v2741 = vadd.f32 %v2740, %v2309
    %v2742 = vadd.f32 %v2741, %v2313
    %v2743 = vadd.f32 %v2742, %v2317
    %v2744 = vadd.f32 %v2743, %v2321
    %v2745 = vadd.f32 %v2744, %v2325
    %v2746 = vadd.f32 %v2745, %v2329
    %v2747 = vadd.f32 %v2746, %v2333
    %v2748 = vadd.f32 %v2747, %v2337
    %v2749 = vadd.f32 %v2748, %v2341
    %v2750 = vadd.f32 %v2749, %v2345
    %v2751 = vadd.f32 %v2750, %v2349
    %v2752 = vadd.f32 %v2751, %v2353
    %v2753 = vadd.f32 %v2752, %v2357
    %v2754 = vadd.f32 %v2753, %v2361
    %v2755 = vadd.f32 %v2754, %v2365
    %v2756 = vadd.f32 %v2755, %v2369
    %v2757 = vadd.f32 %v2756, %v2373
    %v2758 = vadd.f32 %v2757, %v2377
    %v2759 = vadd.f32 %v2758, %v2381
    %v2760 = vadd.f32 %v2759, %v2385
    %v2761 = vadd.f32 %v2760, %v2389
    %v2762 = vadd.f32 %v2761, %v2393
    %v2763 = vadd.f32 %v2762, %v2397
    %v2764 = vadd.f32 %v2763, %v2401
    %v2765 = vadd.f32 %v2764, %v2405
    %v2766 = vadd.f32 %v2765, %v2409
    %v2767 = vadd.f32 %v2766, %v2413
    %v2768 = vadd.f32 %v2767, %v2417
    %v2769 = vadd.f32 %v2768, %v2421
    %v2770 = vadd.f32 %v2769, %v2425
    %v2771 = vadd.f32 %v2770, %v2429
    %v2772 = vadd.f32 %v2771, %v2433
    %v2773 = vadd.f32 %v2772, %v2437
    %v2774 = vadd.f32 %v2773, %v2441
    %v2775 = vadd.f32 %v2774, %v2445
    %v2776 = vadd.f32 %v2775, %v2449
    %v2777 = vadd.f32 %v2776, %v2453
    %v2778 = vadd.f32 %v2777, %v2457
    %v2779 = vadd.f32 %v2778, %v2461
    %v2780 = vadd.f32 %v2779, %v2465
    %v2781 = vadd.f32 %v2780, %v2469
    %v2782 = vadd.f32 %v2781, %v2473
    %v2783 = vadd.f32 %v2782, %v2477
    %v2784 = vadd.f32 %v2783, %v2481
    %v2785 = vadd.f32 %v2784, %v2485
    %v2786 = vadd.f32 %v2785, %v2489
    %v2787 = vadd.f32 %v2786, %v2493
    %v2788 = vadd.f32 %v2787, %v2497
    %v2789 = vadd.f32 %v2788, %v2501
    %v2790 = vadd.f32 %v2789, %v2505
    %v2791 = vadd.f32 %v2790, %v2509
    %v2792 = vadd.f32 %v2791, %v2513
    %v2793 = vadd.f32 %v2792, %v2517
    %v2794 = vadd.f32 %v2793, %v2521
    %v2795 = vadd.f32 %v2794, %v2525
    %v2796 = vadd.f32 %v2795, %v2529
    %v2797 = vadd.f32 %v2796, %v2533
    %v2798 = vadd.f32 %v2797, %v2537
    %v2799 = vadd.f32 %v2798, %v2541
    %v2800 = vadd.f32 %v2799, %v2545
    %v2801 = vadd.f32 %v2800, %v2549
    %v2802 = vadd.f32 %v2290, %v2612
    %v2803 = vadd.f32 %v2291, %v2675
    %v2804 = vadd.f32 %v2292, %v2738
    %v2805 = vadd.f32 %v2293, %v2801
    %2806 = vst [vmem:[#allocation6] sm:$0xff] %v2802
    %2807 = vst [vmem:[#allocation6 + $0x8] sm:$0xff] %v2803
    %2808 = vst [vmem:[#allocation6 + $0x10] sm:$0xff] %v2804
    %2809 = vst [vmem:[#allocation6 + $0x18] sm:$0xff] %v2805
    // Predicated region
    $region18: #{tpu_custom_call.1} parent=1 // pred_check
      _
    $region19: #{tpu_custom_call.1} parent=1 // pred_check_branch
      %2811 = sbr.rel (0) target = $region21
    $region20: #{tpu_custom_call.1} parent=1 // pred_region
      %s2813 = ssub.s32 16384, 16384
      %2814 = vsyncadd [#allocation3], %s2813
      %s2815 = sshll.u32 [#allocation2], 4
      %s2816 = int_to_ptr.vmem [resolvable:$true] %s2815
      %2821 = dma.vmem_to_hbm [thread:$0]  %s2816, 16384, %s3, [#allocation3], 256, 256, 16
    $region21: #{tpu_custom_call.1} parent=1 // pred_fallthru
      _
    // Predicated region
    $region22: #{tpu_custom_call.1} parent=1 // pred_check
      _
    $region23: #{tpu_custom_call.1} parent=1 // pred_check_branch
      %2823 = sbr.rel (0) target = $region25
    $region24: #{tpu_custom_call.1} parent=1 // pred_region
      %s2825 = ssub.s32 512, 512
      %2826 = vsyncadd [#allocation5], %s2825
      %s2828 = sshll.u32 [#allocation4], 4
      %s2829 = int_to_ptr.vmem [resolvable:$true] %s2828
      %2831 = dma.vmem_to_hbm [thread:$0]  %s2829, 512, %s4, [#allocation5]
    $region25: #{tpu_custom_call.1} parent=1 // pred_fallthru
      _
    // Predicated region
    $region26: #{tpu_custom_call.1} parent=1 // pred_check
      _
    $region27: #{tpu_custom_call.1} parent=1 // pred_check_branch
      %2833 = sbr.rel (0) target = $region29
    $region28: #{tpu_custom_call.1} parent=1 // pred_region
      %s2835 = ssub.s32 512, 512
      %2836 = vsyncadd [#allocation5], %s2835
      %s2838 = sshll.u32 [#allocation6], 4
      %s2839 = int_to_ptr.vmem [resolvable:$true] %s2838
      %2841 = dma.vmem_to_hbm [thread:$0]  %s2839, 512, %s5, [#allocation5]
    $region29: #{tpu_custom_call.1} parent=1 // pred_fallthru
      _
    // Predicated region
    $region30: #{tpu_custom_call.1} parent=1 // pred_check
      _
    $region31: #{tpu_custom_call.1} parent=1 // pred_check_branch
      %2843 = sbr.rel (0) target = $region33
    $region32: #{tpu_custom_call.1} parent=1 // pred_region
      %2844 = dma.done [#allocation3], 16384
    $region33: #{tpu_custom_call.1} parent=1 // pred_fallthru
      _
    // Predicated region
    $region34: #{tpu_custom_call.1} parent=1 // pred_check
      _
    $region35: #{tpu_custom_call.1} parent=1 // pred_check_branch
      %2846 = sbr.rel (0) target = $region37
    $region36: #{tpu_custom_call.1} parent=1 // pred_region
      %2847 = dma.done [#allocation5], 512
    $region37: #{tpu_custom_call.1} parent=1 // pred_fallthru
      _
    // Predicated region
    $region38: #{tpu_custom_call.1} parent=1 // pred_check
      _
    $region39: #{tpu_custom_call.1} parent=1 // pred_check_branch
      %2849 = sbr.rel (0) target = $region41
    $region40: #{tpu_custom_call.1} parent=1 // pred_region
      %2850 = dma.done [#allocation5], 512
    $region41: #{tpu_custom_call.1} parent=1 // pred_fallthru
      _
    %2851 = vsyncpa [#allocation3], 1
    %2852 = vsyncpa [#allocation5], 1

</llo_original>
